<compile_context>
chip_gen: v7x
topology: tpu7x:2x2x1
jax: 0.10.0
libtpu: 0.0.40
codegen_flags: <defaults>
</compile_context>

<pallas_src>
import math
import functools

import jax
import jax.numpy as jnp
from jax import lax
from jax.experimental import pallas as pl
from jax.experimental.pallas import tpu as pltpu


# --------------------------------------------------------------------------- #
# Chip introspection (with safe fallbacks)
# --------------------------------------------------------------------------- #
def _vmem_capacity_bytes():
    try:
        cap = int(getattr(pltpu.get_tpu_info(), "vmem_capacity_bytes", 0))
        if cap > 0:
            return cap
    except Exception:
        pass
    # Conservative fallback: smallest per-TC VMEM across v5e / v6e / v7x.
    return 64 * 1024 * 1024


def _num_tensorcores():
    try:
        kind = jax.devices()[0].device_kind.lower()
    except Exception:
        return 1
    # v5e / v6e expose a single TensorCore per JAX device; later chips (v7x,
    # megacore parts) expose two. Only force grid >= 2 where it buys parallelism.
    if ("v5" in kind and ("lite" in kind or "v5e" in kind)) or (
        "v6" in kind and ("lite" in kind or "v6e" in kind)
    ):
        return 1
    return 2


# --------------------------------------------------------------------------- #
# Kernels
# --------------------------------------------------------------------------- #
def _attn_kernel_full(x_ref, o_ref, *, scale, mxu_dtype):
    """Whole-S attention for a (G, S, D) slab (scores fit in VMEM)."""
    xf = x_ref[...].astype(jnp.float32)                       # (G, S, D)
    # Fold the softmax scale into the (S, D) LHS, not the (S, S) scores.
    q = (xf * scale).astype(mxu_dtype)
    k = xf.astype(mxu_dtype)                                  # k == v (unscaled)
    # Batched q @ k^T with no explicit transpose: contract D, batch G.
    s = lax.dot_general(
        q, k,
        dimension_numbers=(((2,), (2,)), ((0,), (0,))),
        preferred_element_type=jnp.float32,
    )                                                         # (G, S, S) f32
    m = jnp.max(s, axis=-1, keepdims=True)
    e = jnp.exp(s - m)
    denom = jnp.sum(e, axis=-1, keepdims=True)
    r = pl.reciprocal(denom, approx=True)                     # EUP slot
    r = r * (2.0 - denom * r)                                 # 1 Newton step -> ~f32 exact
    p = (e * r).astype(mxu_dtype)
    o = lax.dot_general(
        p, k,
        dimension_numbers=(((2,), (1,)), ((0,), (0,))),
        preferred_element_type=jnp.float32,
    )                                                         # (G, S, D)
    o_ref[...] = o.astype(o_ref.dtype)


def _attn_kernel_kv(q_ref, kv_ref, o_ref, m_sc, l_sc, acc_sc, *, scale, mxu_dtype):
    """KV-tiled online-softmax path: VMEM use is linear in S."""
    j = pl.program_id(1)

    @pl.when(j == 0)
    def _init():
        m_sc[...] = jnp.full_like(m_sc, -jnp.inf)
        l_sc[...] = jnp.zeros_like(l_sc)
        acc_sc[...] = jnp.zeros_like(acc_sc)

    q = (q_ref[...].astype(jnp.float32) * scale).astype(mxu_dtype)   # (G, S, D)
    k = kv_ref[...].astype(mxu_dtype)                                # (G, T, D)
    s = lax.dot_general(
        q, k,
        dimension_numbers=(((2,), (2,)), ((0,), (0,))),
        preferred_element_type=jnp.float32,
    )                                                                # (G, S, T)
    m_prev = m_sc[...]
    m_new = jnp.maximum(m_prev, jnp.max(s, axis=-1, keepdims=True))
    alpha = jnp.exp(m_prev - m_new)
    p = jnp.exp(s - m_new)
    l_sc[...] = alpha * l_sc[...] + jnp.sum(p, axis=-1, keepdims=True)
    acc_sc[...] = alpha * acc_sc[...] + lax.dot_general(
        p.astype(mxu_dtype), k,
        dimension_numbers=(((2,), (1,)), ((0,), (0,))),
        preferred_element_type=jnp.float32,
    )
    m_sc[...] = m_new

    @pl.when(j == pl.num_programs(1) - 1)
    def _finalize():
        denom = l_sc[...]
        r = pl.reciprocal(denom, approx=True)
        r = r * (2.0 - denom * r)
        o_ref[...] = (acc_sc[...] * r).astype(o_ref.dtype)


# --------------------------------------------------------------------------- #
# Tiling plan
# --------------------------------------------------------------------------- #
def _plan(bh, s, d, budget_bytes, n_tc, kv_tile=None):
    """Pick (G, kv_tile). kv_tile == s => single-block path; else KV-tiled."""

    def per_group_bytes(g, kv):
        scores = 3 * 4 * s * kv                 # s / exp(s) / p can be co-live (f32)
        io = 4 * 4 * s * d                      # double-buffered f32 in + out slabs
        scratch = 0 if kv == s else 4 * (s * d + 2 * s)   # online-softmax acc/m/l
        return g * (scores + io + scratch)

    def best_group(kv):
        best = 0
        for g in range(1, bh + 1):
            if bh % g or per_group_bytes(g, kv) > budget_bytes:
                continue
            # Keep at least n_tc grid steps so every TensorCore gets work,
            # but allow grid=1 on single-TC chips / tiny batch.
            if (bh // g) >= n_tc or bh < n_tc:
                best = g
        return best

    if kv_tile is not None:
        kv_candidates = [kv_tile]
    else:
        kv_candidates = [s] + [kv for kv in (512, 256, 128, 64, 32, 16, 8)
                               if kv < s and s % kv == 0]
    for kv in kv_candidates:
        g = best_group(kv)
        if g:
            return g, kv
    # TODO(synk): even the smallest KV tile exceeds the budget (enormous S*D row);
    # fall back to the smallest legal block and rely on the raised vmem limit.
    return 1, kv_candidates[-1]


# --------------------------------------------------------------------------- #
# Wrapper
# --------------------------------------------------------------------------- #
def sdp_self_attention(x, *, mxu_dtype=jnp.float32, force_kv_tile=None):
    """x: (B, C, S, D) float32 -> (B, C, S, D), matching the PyTorch Model.forward."""
    B, C, S, D = x.shape
    scale = 1.0 / math.sqrt(float(C))          # module scales by sqrt(k.size(1)) == sqrt(C)
    BH = B * C
    xf = x.reshape(BH, S, D)

    # Budget and the compiler scoped limit are derived from the same constants.
    vmem_cap = _vmem_capacity_bytes()
    vmem_limit = min((vmem_cap * 3) // 4, 48 * 1024 * 1024)   # ~48 MiB on v7x, raised on v5e
    budget = (vmem_limit * 4) // 5                            # headroom for compiler scratch
    n_tc = _num_tensorcores()

    G, kv = _plan(BH, S, D, budget, n_tc, kv_tile=force_kv_tile)

    if kv == S:
        # Single-block path: full S x S scores per head group.
        kernel = functools.partial(_attn_kernel_full, scale=scale, mxu_dtype=mxu_dtype)
        out = pl.pallas_call(
            kernel,
            out_shape=jax.ShapeDtypeStruct((BH, S, D), x.dtype),
            grid_spec=pltpu.PrefetchScalarGridSpec(
                num_scalar_prefetch=0,
                grid=(BH // G,),
                in_specs=[pl.BlockSpec((G, S, D), lambda i: (i, 0, 0))],
                out_specs=pl.BlockSpec((G, S, D), lambda i: (i, 0, 0)),
            ),
            compiler_params=pltpu.CompilerParams(
                dimension_semantics=("parallel",),
                vmem_limit_bytes=vmem_limit,
            ),
        )(xf)
    else:
        # KV-tiled online-softmax path: VMEM linear in S.
        kernel = functools.partial(_attn_kernel_kv, scale=scale, mxu_dtype=mxu_dtype)
        out = pl.pallas_call(
            kernel,
            out_shape=jax.ShapeDtypeStruct((BH, S, D), x.dtype),
            grid_spec=pltpu.PrefetchScalarGridSpec(
                num_scalar_prefetch=0,
                grid=(BH // G, S // kv),
                in_specs=[pl.BlockSpec((G, S, D), lambda i, j: (i, 0, 0)),   # q (resident)
                          pl.BlockSpec((G, kv, D), lambda i, j: (i, j, 0))], # k == v tile
                out_specs=pl.BlockSpec((G, S, D), lambda i, j: (i, 0, 0)),
                scratch_shapes=[pltpu.VMEM((G, S, 1), jnp.float32),   # running max
                                pltpu.VMEM((G, S, 1), jnp.float32),   # running sum
                                pltpu.VMEM((G, S, D), jnp.float32)],  # accumulator
            ),
            compiler_params=pltpu.CompilerParams(
                dimension_semantics=("parallel", "arbitrary"),
                vmem_limit_bytes=vmem_limit,
            ),
        )(xf, xf)
    return out.reshape(B, C, S, D)


class Model:
    """JAX port of the PyTorch Model. `key` param is created but unused in
    forward, exactly as in the reference module."""

    def __init__(self, rng):
        # torch.nn.Parameter(torch.randn(64, 256, 8)) — unused in forward.
        self.key = jax.random.normal(rng, (64, 256, 8), dtype=jnp.float32)

    def __call__(self, x1):
        return sdp_self_attention(x1)


def _reference(x):
    B, C, S, D = x.shape
    inv_scale = math.sqrt(float(C))
    s = jnp.einsum("bcsd,bctd->bcst", x, x, precision=lax.Precision.HIGHEST) / inv_scale
    p = jax.nn.softmax(s, axis=-1)
    return jnp.einsum("bcst,bctd->bcsd", p, x, precision=lax.Precision.HIGHEST)


if __name__ == "__main__":
    key = jax.random.PRNGKey(0)
    k_param, k_x = jax.random.split(key)

    model = Model(k_param)

    # Small shape consistent with the module's (1, 32, 64, 64) forward:
    # batch=2, channels(heads)=4, seq=64, head_dim=64 (last two dims full-block).
    x1 = jax.random.normal(k_x, (2, 4, 64, 64), dtype=jnp.float32)

    ref = _reference(x1)

    # 1) Default path (f32 MXU operands): must match the f32 reference tightly.
    out = jax.block_until_ready(model(x1))
    assert out.shape == x1.shape and out.dtype == x1.dtype
    assert jnp.allclose(out, ref, atol=1e-5, rtol=1e-5), "f32 path mismatch vs reference"

    # 2) bf16-MXU fast path (perf feedback): softmax + accumulation stay f32;
    #    validated with a tolerance appropriate for bf16 operands.
    out_bf16 = jax.block_until_ready(sdp_self_attention(x1, mxu_dtype=jnp.bfloat16))
    assert jnp.allclose(out_bf16, ref, atol=5e-2, rtol=5e-2), "bf16 path mismatch"

    # 3) KV-tiled online-softmax fallback, force-exercised at a small KV tile.
    out_kv = jax.block_until_ready(sdp_self_attention(x1, force_kv_tile=16))
    assert jnp.allclose(out_kv, ref, atol=1e-5, rtol=1e-5), "KV-tiled path mismatch"

    print("KERNEL_OK")
</pallas_src>

<mosaic_0001>
module attributes {stable_mosaic.version = 11 : i64} {
  func.func @_attn_kernel_full(%arg0: i32, %arg1: memref<4x64x64xf32, #tpu.memory_space<vmem>>, %arg2: memref<4x64x64xf32, #tpu.memory_space<vmem>>) attributes {dimension_semantics = [#tpu.dimension_semantics<parallel>], iteration_bounds = array<i64: 2>, scalar_prefetch = 0 : i64, scratch_operands = 0 : i64, tpu.core_type = #tpu.core_type<tc>, window_params = [{transform_indices = @transform_0, window_bounds = array<i64: 4, 64, 64>}, {transform_indices = @transform_1, window_bounds = array<i64: 4, 64, 64>}]} {
    %c0 = arith.constant 0 : index
    %c0_0 = arith.constant 0 : index
    %c0_1 = arith.constant 0 : index
    %0 = vector.load %arg1[%c0, %c0_0, %c0_1] : memref<4x64x64xf32, #tpu.memory_space<vmem>>, vector<4x64x64xf32>
    %cst = arith.constant 5.000000e-01 : f32
    %1 = vector.broadcast %cst : f32 to vector<4x64x64xf32>
    %2 = arith.mulf %0, %1 : vector<4x64x64xf32>
    %cst_2 = arith.constant dense<0.000000e+00> : vector<4x64x64xf32>
    %3 = tpu.matmul %2, %0, %cst_2 {dimension_numbers = #tpu.dot_dimension_numbers<[2], [2], [1], [1], [0, 0, 0, 1, 1, 1], [0], [0]>} : vector<4x64x64xf32>, vector<4x64x64xf32>, vector<4x64x64xf32> -> vector<4x64x64xf32>
    %cst_3 = arith.constant dense<0xFF800000> : vector<4x64xf32>
    %4 = vector.multi_reduction <maximumf>, %3, %cst_3 [2] : vector<4x64x64xf32> to vector<4x64xf32>
    %5 = vector.shape_cast %4 : vector<4x64xf32> to vector<4x64x1xf32>
    %6 = vector.broadcast %5 : vector<4x64x1xf32> to vector<4x64x64xf32>
    %7 = arith.subf %3, %6 : vector<4x64x64xf32>
    %8 = math.exp %7 : vector<4x64x64xf32>
    %cst_4 = arith.constant dense<0.000000e+00> : vector<4x64xf32>
    %9 = vector.multi_reduction <add>, %8, %cst_4 [2] : vector<4x64x64xf32> to vector<4x64xf32>
    %10 = vector.shape_cast %9 : vector<4x64xf32> to vector<4x64x1xf32>
    %11 = tpu.reciprocal %10 {approx = true} : vector<4x64x1xf32> -> vector<4x64x1xf32>
    %12 = arith.mulf %10, %11 : vector<4x64x1xf32>
    %cst_5 = arith.constant 2.000000e+00 : f32
    %13 = vector.broadcast %cst_5 : f32 to vector<4x64x1xf32>
    %14 = arith.subf %13, %12 : vector<4x64x1xf32>
    %15 = arith.mulf %11, %14 : vector<4x64x1xf32>
    %16 = vector.broadcast %15 : vector<4x64x1xf32> to vector<4x64x64xf32>
    %17 = arith.mulf %8, %16 : vector<4x64x64xf32>
    %cst_6 = arith.constant dense<0.000000e+00> : vector<4x64x64xf32>
    %18 = tpu.matmul %17, %0, %cst_6 {dimension_numbers = #tpu.dot_dimension_numbers<[2], [1], [1], [2], [0, 0, 0, 1, 1, 2], [0], [0]>} : vector<4x64x64xf32>, vector<4x64x64xf32>, vector<4x64x64xf32> -> vector<4x64x64xf32>
    %c0_7 = arith.constant 0 : index
    %c0_8 = arith.constant 0 : index
    %c0_9 = arith.constant 0 : index
    %19 = vector.load %arg2[%c0_7, %c0_8, %c0_9] : memref<4x64x64xf32, #tpu.memory_space<vmem>>, vector<4x64x64xf32>
    tpu.vector_store %arg2[%c0_7, %c0_8, %c0_9], %18 {strides = array<i32>} : memref<4x64x64xf32, #tpu.memory_space<vmem>>, vector<4x64x64xf32>,
    return
  }
  func.func @transform_0(%arg0: i32) -> (i32, i32, i32) {
    %c0_i32 = arith.constant 0 : i32
    %c0_i32_0 = arith.constant 0 : i32
    %c0_i32_1 = arith.constant 0 : i32
    return %arg0, %c0_i32, %c0_i32_0 : i32, i32, i32
  }
  func.func @transform_1(%arg0: i32) -> (i32, i32, i32) {
    %c0_i32 = arith.constant 0 : i32
    %c0_i32_0 = arith.constant 0 : i32
    %c0_i32_1 = arith.constant 0 : i32
    return %arg0, %c0_i32, %c0_i32_0 : i32, i32, i32
  }
}

</mosaic_0001>

<llo_original>
// kernel: tpu_custom_call.1
$region0: #{tpu_custom_call.1}
  #allocation0 [shape = 'u32[]', space=smem, size = 0x4, offset = 0x4, fixed_abs, tag = 'smem constant byte address 0x4 - core index']
  #allocation1 [shape = 'u32[144,128]{1,0:T(1,128)}', space=vmem, size = 0x12000, scoped, tag = 'internal scratch']
  %s0 = inlined_call_operand.hbm [shape: f32[8,64,64], index: 0, kind: input, shape index: {}]
  %s1 = inlined_call_operand.hbm [shape: f32[8,64,64], index: 1, kind: output, shape index: {}]
  %s2 = sld [smem:[#allocation0]]
  $region41: #{tpu_custom_call.1} parent=0
    _
  %s4 = ssub.s32 1, %s2
  %s5 = scalar_select 0, %s4, %s2
  $region1: #{tpu_custom_call.1} parent=0
    #allocation2 [shape = 'u8[262144]{0}', space=vmem, size = 0x40000, scoped, tag = 'input window, operand 0']
    #allocation3 [shape = 's32[2]{0}', space=sflag, size = 0x8, scoped, tag = 'scoped memory for tpu_custom_call.1']
    #allocation4 [shape = 's32[2]{0}', space=sflag, size = 0x8, scoped, tag = 'scoped memory for tpu_custom_call.1']
    #allocation5 [shape = 'u8[262144]{0}', space=vmem, size = 0x40000, scoped, tag = 'output window, operand 0']
    %6 = vsyncpa [#allocation3], 0
    %s7 = scalar_lea.sflag [#allocation3], 1
    %8 = vsyncpa %s7, 0
    %9 = vsyncpa [#allocation4], 0
    %s10 = scalar_lea.sflag [#allocation4], 1
    %11 = vsyncpa %s10, 0
    loop: start=0, step=1, limit=4
    $region2: #{tpu_custom_call.1} parent=1 // loop_pre_header
      _
    $region3: #{tpu_custom_call.1} parent=1 // loop_header
      %s13 = sphi 0, %s17
      %p14 = scmp.ge.s32.totalorder %s13, 4
      %s23 = sphi 0, %s25
      %s26 = sphi 0, %s23
      %s27 = sphi 0, %s26
      %s43 = sphi 0, %s27
      %s49 = sphi 0, %s51
      %s52 = sphi 0, %s49
      %s53 = sphi 0, %s52
      %s69 = sphi 0, %s53
    $region4: #{tpu_custom_call.1} parent=1 // loop_header_branch
      %16 = sbr.rel (%p14) target = $region8
    $region5: #{tpu_custom_call.1} parent=1 // loop_body
      %s18 = ssub.s32 %s13, 1
      %s19 = ssub.s32 %s13, 2
      %s20 = sadd.s32 %s13, 1
      %s21 = ssub.s32 %s13, %s20
      %p22 = scmp.eq.s32.totalorder %s21, 0
      %s24 = sadd.s32 %s23, 1
      %s25 = scalar_select %p22, %s23, %s24
      %p28 = pneg %p22
      %p29 = scmp.eq.s32.totalorder %s13, 1
      %p30 = por %p28, %p29
      %p31 = scmp.ne.s32.totalorder %s23, %s26
      %p32 = scmp.eq.s32.totalorder %s13, 0
      %p33 = por %p31, %p32
      %p34 = scmp.ne.s32.totalorder %s23, %s26
      %p35 = scmp.eq.s32.totalorder %s18, 1
      %p36 = por %p34, %p35
      %p37 = scmp.ne.s32.totalorder %s26, %s27
      %p38 = scmp.eq.s32.totalorder %s18, 0
      %p39 = por %p37, %p38
      %p40 = scmp.ne.s32.totalorder %s26, %s27
      %p41 = scmp.eq.s32.totalorder %s19, 1
      %p42 = por %p40, %p41
      %p44 = scmp.ne.s32.totalorder %s27, %s43
      %p45 = scmp.eq.s32.totalorder %s19, 0
      %p46 = por %p44, %p45
      %s47 = ssub.s32 %s13, %s20
      %p48 = scmp.eq.s32.totalorder %s47, 0
      %s50 = sadd.s32 %s49, 1
      %s51 = scalar_select %p48, %s49, %s50
      %p54 = pneg %p48
      %p55 = scmp.eq.s32.totalorder %s13, 1
      %p56 = por %p54, %p55
      %p57 = scmp.ne.s32.totalorder %s49, %s52
      %p58 = scmp.eq.s32.totalorder %s13, 0
      %p59 = por %p57, %p58
      %p60 = scmp.ne.s32.totalorder %s49, %s52
      %p61 = scmp.eq.s32.totalorder %s18, 1
      %p62 = por %p60, %p61
      %p63 = scmp.ne.s32.totalorder %s52, %s53
      %p64 = scmp.eq.s32.totalorder %s18, 0
      %p65 = por %p63, %p64
      %p66 = scmp.ne.s32.totalorder %s52, %s53
      %p67 = scmp.eq.s32.totalorder %s19, 1
      %p68 = por %p66, %p67
      %p70 = scmp.ne.s32.totalorder %s53, %s69
      %p71 = scmp.eq.s32.totalorder %s19, 0
      %p72 = por %p70, %p71
      %p73 = scmp.le.s32.totalorder 1, %s13
      %p74 = scmp.lt.s32.totalorder %s13, 3
      %p75 = pnand %p73, %p74
      %p76 = pneg %p75
      // Predicated region
      $region9: #{tpu_custom_call.1} parent=5 // pred_check
        _
      $region10: #{tpu_custom_call.1} parent=5 // pred_check_branch
        %78 = sbr.rel (%p75) target = $region12
      $region11: #{tpu_custom_call.1} parent=5 // pred_region
        %s79 = ssub.s32 %s13, 1
      $region12: #{tpu_custom_call.1} parent=5 // pred_fallthru
        _
      %p80 = scmp.lt.s32.totalorder %s13, 2
      // Predicated region
      $region13: #{tpu_custom_call.1} parent=5 // pred_check
        %p81 = pneg %p80
      $region14: #{tpu_custom_call.1} parent=5 // pred_check_branch
        %83 = sbr.rel (%p81) target = $region16
      $region15: #{tpu_custom_call.1} parent=5 // pred_region
        // Predicated region
        $region17: #{tpu_custom_call.1} parent=15 // pred_check
          %p84 = pneg %p33
        $region18: #{tpu_custom_call.1} parent=15 // pred_check_branch
          %86 = sbr.rel (%p84) target = $region20
        $region19: #{tpu_custom_call.1} parent=15 // pred_region
          %s87 = sand.u32 %s23, 1
          %s88 = scalar_lea.sflag [#allocation3], %s87
          %s89 = sand.u32 %s23, 1
          %s90 = smul.addr %s89, 256
          %s91 = scalar_lea.vmem [#allocation2], %s90
          %s92 = smul.u32 4, %s13
          %s94 = ssub.s32 4096, 4096
          %95 = vsyncadd %s88, %s94
          %s96 = smul.addr %s92, 8
          %s97 = smul.addr %s96, 128
          %s98 = scalar_lea.hbm %s0, %s97
          %s99 = sshll.u32 %s91, 4
          %s100 = int_to_ptr.vmem [resolvable:$true] %s99
          %105 = dma.hbm_to_vmem [thread:$0]  %s98, 4096, %s100, %s88, 128, 128, 8
        $region20: #{tpu_custom_call.1} parent=15 // pred_fallthru
          _
      $region16: #{tpu_custom_call.1} parent=5 // pred_fallthru
        _
      %p106 = scmp.le.s32.totalorder 1, %s13
      %p107 = scmp.lt.s32.totalorder %s13, 3
      %p108 = pnand %p106, %p107
      %p109 = pneg %p108
      // Predicated region
      $region21: #{tpu_custom_call.1} parent=5 // pred_check
        _
      $region22: #{tpu_custom_call.1} parent=5 // pred_check_branch
        %111 = sbr.rel (%p108) target = $region24
      $region23: #{tpu_custom_call.1} parent=5 // pred_region
        %s112 = ssub.s32 %s13, 1
        %s113 = sand.u32 %s26, 1
        %s114 = scalar_lea.sflag [#allocation3], %s113
        %s115 = sand.u32 %s26, 1
        %s116 = smul.addr %s115, 256
        %s117 = scalar_lea.vmem [#allocation2], %s116
        // Predicated region
        $region25: #{tpu_custom_call.1} parent=23 // pred_check
          %p118 = pneg %p39
        $region26: #{tpu_custom_call.1} parent=23 // pred_check_branch
          %120 = sbr.rel (%p118) target = $region28
        $region27: #{tpu_custom_call.1} parent=23 // pred_region
          %121 = dma.done %s114, 4096
        $region28: #{tpu_custom_call.1} parent=23 // pred_fallthru
          _
        %s122 = sand.u32 %s26, 1
        %s123 = scalar_lea.sflag [#allocation3], %s122
        %s124 = sand.u32 %s26, 1
        %s125 = smul.addr %s124, 256
        %s126 = scalar_lea.vmem [#allocation2], %s125
        %p127 = pneg %p39
        %p128 = pneg %p36
        %p129 = pneg %p65
        %p130 = pneg %p62
        %s131 = sand.u32 %s52, 1
        %s132 = scalar_lea.sflag [#allocation4], %s131
        %s133 = sand.u32 %s52, 1
        %s134 = smul.addr %s133, 256
        %s135 = scalar_lea.vmem [#allocation5], %s134
        %s136 = smul.u32 4, %s18
        %s137 = smul.u32 4, %s18
        %v138 = vld [vmem:[%s117] sm:$0xff]
        %v139 = vld [vmem:[%s117 + $0x8] sm:$0xff]
        %v140 = vld [vmem:[%s117 + $0x10] sm:$0xff]
        %v141 = vld [vmem:[%s117 + $0x18] sm:$0xff]
        %v142 = vld [vmem:[%s117 + $0x20] sm:$0xff]
        %v143 = vld [vmem:[%s117 + $0x28] sm:$0xff]
        %v144 = vld [vmem:[%s117 + $0x30] sm:$0xff]
        %v145 = vld [vmem:[%s117 + $0x38] sm:$0xff]
        %v146 = vld [vmem:[%s117 + $0x40] sm:$0xff]
        %v147 = vld [vmem:[%s117 + $0x48] sm:$0xff]
        %v148 = vld [vmem:[%s117 + $0x50] sm:$0xff]
        %v149 = vld [vmem:[%s117 + $0x58] sm:$0xff]
        %v150 = vld [vmem:[%s117 + $0x60] sm:$0xff]
        %v151 = vld [vmem:[%s117 + $0x68] sm:$0xff]
        %v152 = vld [vmem:[%s117 + $0x70] sm:$0xff]
        %v153 = vld [vmem:[%s117 + $0x78] sm:$0xff]
        %v154 = vld [vmem:[%s117 + $0x80] sm:$0xff]
        %v155 = vld [vmem:[%s117 + $0x88] sm:$0xff]
        %v156 = vld [vmem:[%s117 + $0x90] sm:$0xff]
        %v157 = vld [vmem:[%s117 + $0x98] sm:$0xff]
        %v158 = vld [vmem:[%s117 + $0xa0] sm:$0xff]
        %v159 = vld [vmem:[%s117 + $0xa8] sm:$0xff]
        %v160 = vld [vmem:[%s117 + $0xb0] sm:$0xff]
        %v161 = vld [vmem:[%s117 + $0xb8] sm:$0xff]
        %v162 = vld [vmem:[%s117 + $0xc0] sm:$0xff]
        %v163 = vld [vmem:[%s117 + $0xc8] sm:$0xff]
        %v164 = vld [vmem:[%s117 + $0xd0] sm:$0xff]
        %v165 = vld [vmem:[%s117 + $0xd8] sm:$0xff]
        %v166 = vld [vmem:[%s117 + $0xe0] sm:$0xff]
        %v167 = vld [vmem:[%s117 + $0xe8] sm:$0xff]
        %v168 = vld [vmem:[%s117 + $0xf0] sm:$0xff]
        %v169 = vld [vmem:[%s117 + $0xf8] sm:$0xff]
        %v170 = vmul.f32 %v138, 0.5
        %v171 = vmul.f32 %v139, 0.5
        %v172 = vmul.f32 %v140, 0.5
        %v173 = vmul.f32 %v141, 0.5
        %v174 = vmul.f32 %v142, 0.5
        %v175 = vmul.f32 %v143, 0.5
        %v176 = vmul.f32 %v144, 0.5
        %v177 = vmul.f32 %v145, 0.5
        %v178 = vmul.f32 %v146, 0.5
        %v179 = vmul.f32 %v147, 0.5
        %v180 = vmul.f32 %v148, 0.5
        %v181 = vmul.f32 %v149, 0.5
        %v182 = vmul.f32 %v150, 0.5
        %v183 = vmul.f32 %v151, 0.5
        %v184 = vmul.f32 %v152, 0.5
        %v185 = vmul.f32 %v153, 0.5
        %v186 = vmul.f32 %v154, 0.5
        %v187 = vmul.f32 %v155, 0.5
        %v188 = vmul.f32 %v156, 0.5
        %v189 = vmul.f32 %v157, 0.5
        %v190 = vmul.f32 %v158, 0.5
        %v191 = vmul.f32 %v159, 0.5
        %v192 = vmul.f32 %v160, 0.5
        %v193 = vmul.f32 %v161, 0.5
        %v194 = vmul.f32 %v162, 0.5
        %v195 = vmul.f32 %v163, 0.5
        %v196 = vmul.f32 %v164, 0.5
        %v197 = vmul.f32 %v165, 0.5
        %v198 = vmul.f32 %v166, 0.5
        %v199 = vmul.f32 %v167, 0.5
        %v200 = vmul.f32 %v168, 0.5
        %v201 = vmul.f32 %v169, 0.5
        %vm202 = vcmask 523264
        %v204 = vsel %vm202, %v170, 0
        %v207 = vsel %vm202, %v171, 0
        %v210 = vsel %vm202, %v172, 0
        %v213 = vsel %vm202, %v173, 0
        %v216 = vsel %vm202, %v174, 0
        %v219 = vsel %vm202, %v175, 0
        %v222 = vsel %vm202, %v176, 0
        %v225 = vsel %vm202, %v177, 0
        %v228 = vsel %vm202, %v138, 0
        %v231 = vsel %vm202, %v139, 0
        %v234 = vsel %vm202, %v140, 0
        %v237 = vsel %vm202, %v141, 0
        %v240 = vsel %vm202, %v142, 0
        %v243 = vsel %vm202, %v143, 0
        %v246 = vsel %vm202, %v144, 0
        %v249 = vsel %vm202, %v145, 0
        %251 = vmatprep.subr.mxu0 0.0
        %252 = vmatpush1.xpose.msra.mxu0 %v228
        %253 = vmatprep.subr.mxu0 0.0
        %254 = vmatpush1.xpose.msra.mxu0 %v231
        %255 = vmatprep.subr.mxu0 0.0
        %256 = vmatpush1.xpose.msra.mxu0 %v234
        %257 = vmatprep.subr.mxu0 0.0
        %258 = vmatpush1.xpose.msra.mxu0 %v237
        %259 = vmatprep.subr.mxu0 0.0
        %260 = vmatpush1.xpose.msra.mxu0 %v240
        %261 = vmatprep.subr.mxu0 0.0
        %262 = vmatpush1.xpose.msra.mxu0 %v243
        %263 = vmatprep.subr.mxu0 0.0
        %264 = vmatpush1.xpose.msra.mxu0 %v246
        %265 = vmatprep.subr.mxu0 0.0
        %266 = vmatpush1.xpose.msra.mxu0 %v249
        %267 = vmatprep.subr.mxu0 0.0
        %268 = vmatpush1.xpose.msra.mxu0 0.0
        %269 = vmatprep.subr.mxu0 0.0
        %270 = vmatpush1.xpose.msra.mxu0 0.0
        %271 = vmatprep.subr.mxu0 0.0
        %272 = vmatpush1.xpose.msra.mxu0 0.0
        %273 = vmatprep.subr.mxu0 0.0
        %274 = vmatpush1.xpose.msra.mxu0 0.0
        %275 = vmatprep.subr.mxu0 0.0
        %276 = vmatpush1.xpose.msra.mxu0 0.0
        %277 = vmatprep.subr.mxu0 0.0
        %278 = vmatpush1.xpose.msra.mxu0 0.0
        %279 = vmatprep.subr.mxu0 0.0
        %280 = vmatpush1.xpose.msra.mxu0 0.0
        %281 = vmatprep.subr.mxu0 0.0
        %282 = vmatpush1.xpose.msra.mxu0 0.0
        %283 = vmatprep.subr.mxu0 0.0
        %284 = vmatpush1.xpose.msra.mxu0 0.0
        %285 = vmatprep.subr.mxu0 0.0
        %286 = vmatpush1.xpose.msra.mxu0 0.0
        %287 = vmatprep.subr.mxu0 0.0
        %288 = vmatpush1.xpose.msra.mxu0 0.0
        %289 = vmatprep.subr.mxu0 0.0
        %290 = vmatpush1.xpose.msra.mxu0 0.0
        %291 = vmatprep.subr.mxu0 0.0
        %292 = vmatpush1.xpose.msra.mxu0 0.0
        %293 = vmatprep.subr.mxu0 0.0
        %294 = vmatpush1.xpose.msra.mxu0 0.0
        %295 = vmatprep.subr.mxu0 0.0
        %296 = vmatpush1.xpose.msra.mxu0 0.0
        %297 = vmatprep.subr.mxu0 0.0
        %298 = vmatpush1.xpose.msra.mxu0 0.0
        %299 = vmatprep.subr.mxu0 0.0
        %300 = vmatpush1.xpose.msra.mxu0 0.0
        %301 = vmatprep.subr.mxu0 0.0
        %302 = vmatpush1.xpose.msra.mxu0 0.0
        %303 = vmatprep.subr.mxu0 0.0
        %304 = vmatpush1.xpose.msra.mxu0 0.0
        %305 = vmatprep.subr.mxu0 0.0
        %306 = vmatpush1.xpose.msra.mxu0 0.0
        %307 = vmatprep.subr.mxu0 0.0
        %308 = vmatpush1.xpose.msra.mxu0 0.0
        %309 = vmatprep.subr.mxu0 0.0
        %310 = vmatpush1.xpose.msra.mxu0 0.0
        %311 = vmatprep.subr.mxu0 0.0
        %312 = vmatpush1.xpose.msra.mxu0 0.0
        %313 = vmatprep.subr.mxu0 0.0
        %314 = vmatpush1.xpose.msra.mxu0 0.0
        %315 = vmatprep.mubr.f32.mxu0 0.0
        %316 = vmatmul.mubr.f32.gmra.mrb[0].mxu0 %v204
        %v317 = vpop.f32.mrb[0].mxu0
        %v318 = vadd.f32 0.0, %v317
        %v319 = vpop.f32.mrb[0].mxu0
        %320 = vmatprep.mubr.f32.mxu0 0.0
        %321 = vmatmul.mubr.f32.gmra.mrb[0].mxu0 %v207
        %v322 = vpop.f32.mrb[0].mxu0
        %v323 = vadd.f32 0.0, %v322
        %v324 = vpop.f32.mrb[0].mxu0
        %325 = vmatprep.mubr.f32.mxu0 0.0
        %326 = vmatmul.mubr.f32.gmra.mrb[0].mxu0 %v210
        %v327 = vpop.f32.mrb[0].mxu0
        %v328 = vadd.f32 0.0, %v327
        %v329 = vpop.f32.mrb[0].mxu0
        %330 = vmatprep.mubr.f32.mxu0 0.0
        %331 = vmatmul.mubr.f32.gmra.mrb[0].mxu0 %v213
        %v332 = vpop.f32.mrb[0].mxu0
        %v333 = vadd.f32 0.0, %v332
        %v334 = vpop.f32.mrb[0].mxu0
        %335 = vmatprep.mubr.f32.mxu0 0.0
        %336 = vmatmul.mubr.f32.gmra.mrb[0].mxu0 %v216
        %v337 = vpop.f32.mrb[0].mxu0
        %v338 = vadd.f32 0.0, %v337
        %v339 = vpop.f32.mrb[0].mxu0
        %340 = vmatprep.mubr.f32.mxu0 0.0
        %341 = vmatmul.mubr.f32.gmra.mrb[0].mxu0 %v219
        %v342 = vpop.f32.mrb[0].mxu0
        %v343 = vadd.f32 0.0, %v342
        %v344 = vpop.f32.mrb[0].mxu0
        %345 = vmatprep.mubr.f32.mxu0 0.0
        %346 = vmatmul.mubr.f32.gmra.mrb[0].mxu0 %v222
        %v347 = vpop.f32.mrb[0].mxu0
        %v348 = vadd.f32 0.0, %v347
        %v349 = vpop.f32.mrb[0].mxu0
        %350 = vmatprep.mubr.f32.mxu0 0.0
        %351 = vmatmul.mubr.f32.gmra.mrb[0].mxu0 %v225
        %v352 = vpop.f32.mrb[0].mxu0
        %v353 = vadd.f32 0.0, %v352
        %v354 = vpop.f32.mrb[0].mxu0
        %355 = vdwg.mxu0
        %v357 = vsel %vm202, %v178, 0
        %v360 = vsel %vm202, %v179, 0
        %v363 = vsel %vm202, %v180, 0
        %v366 = vsel %vm202, %v181, 0
        %v369 = vsel %vm202, %v182, 0
        %v372 = vsel %vm202, %v183, 0
        %v375 = vsel %vm202, %v184, 0
        %v378 = vsel %vm202, %v185, 0
        %v381 = vsel %vm202, %v146, 0
        %v384 = vsel %vm202, %v147, 0
        %v387 = vsel %vm202, %v148, 0
        %v390 = vsel %vm202, %v149, 0
        %v393 = vsel %vm202, %v150, 0
        %v396 = vsel %vm202, %v151, 0
        %v399 = vsel %vm202, %v152, 0
        %v402 = vsel %vm202, %v153, 0
        %404 = vmatprep.subr.mxu0 0.0
        %405 = vmatpush1.xpose.msra.mxu0 %v381
        %406 = vmatprep.subr.mxu0 0.0
        %407 = vmatpush1.xpose.msra.mxu0 %v384
        %408 = vmatprep.subr.mxu0 0.0
        %409 = vmatpush1.xpose.msra.mxu0 %v387
        %410 = vmatprep.subr.mxu0 0.0
        %411 = vmatpush1.xpose.msra.mxu0 %v390
        %412 = vmatprep.subr.mxu0 0.0
        %413 = vmatpush1.xpose.msra.mxu0 %v393
        %414 = vmatprep.subr.mxu0 0.0
        %415 = vmatpush1.xpose.msra.mxu0 %v396
        %416 = vmatprep.subr.mxu0 0.0
        %417 = vmatpush1.xpose.msra.mxu0 %v399
        %418 = vmatprep.subr.mxu0 0.0
        %419 = vmatpush1.xpose.msra.mxu0 %v402
        %420 = vmatprep.subr.mxu0 0.0
        %421 = vmatpush1.xpose.msra.mxu0 0.0
        %422 = vmatprep.subr.mxu0 0.0
        %423 = vmatpush1.xpose.msra.mxu0 0.0
        %424 = vmatprep.subr.mxu0 0.0
        %425 = vmatpush1.xpose.msra.mxu0 0.0
        %426 = vmatprep.subr.mxu0 0.0
        %427 = vmatpush1.xpose.msra.mxu0 0.0
        %428 = vmatprep.subr.mxu0 0.0
        %429 = vmatpush1.xpose.msra.mxu0 0.0
        %430 = vmatprep.subr.mxu0 0.0
        %431 = vmatpush1.xpose.msra.mxu0 0.0
        %432 = vmatprep.subr.mxu0 0.0
        %433 = vmatpush1.xpose.msra.mxu0 0.0
        %434 = vmatprep.subr.mxu0 0.0
        %435 = vmatpush1.xpose.msra.mxu0 0.0
        %436 = vmatprep.subr.mxu0 0.0
        %437 = vmatpush1.xpose.msra.mxu0 0.0
        %438 = vmatprep.subr.mxu0 0.0
        %439 = vmatpush1.xpose.msra.mxu0 0.0
        %440 = vmatprep.subr.mxu0 0.0
        %441 = vmatpush1.xpose.msra.mxu0 0.0
        %442 = vmatprep.subr.mxu0 0.0
        %443 = vmatpush1.xpose.msra.mxu0 0.0
        %444 = vmatprep.subr.mxu0 0.0
        %445 = vmatpush1.xpose.msra.mxu0 0.0
        %446 = vmatprep.subr.mxu0 0.0
        %447 = vmatpush1.xpose.msra.mxu0 0.0
        %448 = vmatprep.subr.mxu0 0.0
        %449 = vmatpush1.xpose.msra.mxu0 0.0
        %450 = vmatprep.subr.mxu0 0.0
        %451 = vmatpush1.xpose.msra.mxu0 0.0
        %452 = vmatprep.subr.mxu0 0.0
        %453 = vmatpush1.xpose.msra.mxu0 0.0
        %454 = vmatprep.subr.mxu0 0.0
        %455 = vmatpush1.xpose.msra.mxu0 0.0
        %456 = vmatprep.subr.mxu0 0.0
        %457 = vmatpush1.xpose.msra.mxu0 0.0
        %458 = vmatprep.subr.mxu0 0.0
        %459 = vmatpush1.xpose.msra.mxu0 0.0
        %460 = vmatprep.subr.mxu0 0.0
        %461 = vmatpush1.xpose.msra.mxu0 0.0
        %462 = vmatprep.subr.mxu0 0.0
        %463 = vmatpush1.xpose.msra.mxu0 0.0
        %464 = vmatprep.subr.mxu0 0.0
        %465 = vmatpush1.xpose.msra.mxu0 0.0
        %466 = vmatprep.subr.mxu0 0.0
        %467 = vmatpush1.xpose.msra.mxu0 0.0
        %468 = vmatprep.mubr.f32.mxu0 0.0
        %469 = vmatmul.mubr.f32.gmra.mrb[0].mxu0 %v357
        %v470 = vpop.f32.mrb[0].mxu0
        %v471 = vadd.f32 0.0, %v470
        %v472 = vpop.f32.mrb[0].mxu0
        %473 = vmatprep.mubr.f32.mxu0 0.0
        %474 = vmatmul.mubr.f32.gmra.mrb[0].mxu0 %v360
        %v475 = vpop.f32.mrb[0].mxu0
        %v476 = vadd.f32 0.0, %v475
        %v477 = vpop.f32.mrb[0].mxu0
        %478 = vmatprep.mubr.f32.mxu0 0.0
        %479 = vmatmul.mubr.f32.gmra.mrb[0].mxu0 %v363
        %v480 = vpop.f32.mrb[0].mxu0
        %v481 = vadd.f32 0.0, %v480
        %v482 = vpop.f32.mrb[0].mxu0
        %483 = vmatprep.mubr.f32.mxu0 0.0
        %484 = vmatmul.mubr.f32.gmra.mrb[0].mxu0 %v366
        %v485 = vpop.f32.mrb[0].mxu0
        %v486 = vadd.f32 0.0, %v485
        %v487 = vpop.f32.mrb[0].mxu0
        %488 = vmatprep.mubr.f32.mxu0 0.0
        %489 = vmatmul.mubr.f32.gmra.mrb[0].mxu0 %v369
        %v490 = vpop.f32.mrb[0].mxu0
        %v491 = vadd.f32 0.0, %v490
        %v492 = vpop.f32.mrb[0].mxu0
        %493 = vmatprep.mubr.f32.mxu0 0.0
        %494 = vmatmul.mubr.f32.gmra.mrb[0].mxu0 %v372
        %v495 = vpop.f32.mrb[0].mxu0
        %v496 = vadd.f32 0.0, %v495
        %v497 = vpop.f32.mrb[0].mxu0
        %498 = vmatprep.mubr.f32.mxu0 0.0
        %499 = vmatmul.mubr.f32.gmra.mrb[0].mxu0 %v375
        %v500 = vpop.f32.mrb[0].mxu0
        %v501 = vadd.f32 0.0, %v500
        %v502 = vpop.f32.mrb[0].mxu0
        %503 = vmatprep.mubr.f32.mxu0 0.0
        %504 = vmatmul.mubr.f32.gmra.mrb[0].mxu0 %v378
        %v505 = vpop.f32.mrb[0].mxu0
        %v506 = vadd.f32 0.0, %v505
        %v507 = vpop.f32.mrb[0].mxu0
        %508 = vdwg.mxu0
        %v510 = vsel %vm202, %v186, 0
        %v513 = vsel %vm202, %v187, 0
        %v516 = vsel %vm202, %v188, 0
        %v519 = vsel %vm202, %v189, 0
        %v522 = vsel %vm202, %v190, 0
        %v525 = vsel %vm202, %v191, 0
        %v528 = vsel %vm202, %v192, 0
        %v531 = vsel %vm202, %v193, 0
        %v534 = vsel %vm202, %v154, 0
        %v537 = vsel %vm202, %v155, 0
        %v540 = vsel %vm202, %v156, 0
        %v543 = vsel %vm202, %v157, 0
        %v546 = vsel %vm202, %v158, 0
        %v549 = vsel %vm202, %v159, 0
        %v552 = vsel %vm202, %v160, 0
        %v555 = vsel %vm202, %v161, 0
        %557 = vmatprep.subr.mxu0 0.0
        %558 = vmatpush1.xpose.msra.mxu0 %v534
        %559 = vmatprep.subr.mxu0 0.0
        %560 = vmatpush1.xpose.msra.mxu0 %v537
        %561 = vmatprep.subr.mxu0 0.0
        %562 = vmatpush1.xpose.msra.mxu0 %v540
        %563 = vmatprep.subr.mxu0 0.0
        %564 = vmatpush1.xpose.msra.mxu0 %v543
        %565 = vmatprep.subr.mxu0 0.0
        %566 = vmatpush1.xpose.msra.mxu0 %v546
        %567 = vmatprep.subr.mxu0 0.0
        %568 = vmatpush1.xpose.msra.mxu0 %v549
        %569 = vmatprep.subr.mxu0 0.0
        %570 = vmatpush1.xpose.msra.mxu0 %v552
        %571 = vmatprep.subr.mxu0 0.0
        %572 = vmatpush1.xpose.msra.mxu0 %v555
        %573 = vmatprep.subr.mxu0 0.0
        %574 = vmatpush1.xpose.msra.mxu0 0.0
        %575 = vmatprep.subr.mxu0 0.0
        %576 = vmatpush1.xpose.msra.mxu0 0.0
        %577 = vmatprep.subr.mxu0 0.0
        %578 = vmatpush1.xpose.msra.mxu0 0.0
        %579 = vmatprep.subr.mxu0 0.0
        %580 = vmatpush1.xpose.msra.mxu0 0.0
        %581 = vmatprep.subr.mxu0 0.0
        %582 = vmatpush1.xpose.msra.mxu0 0.0
        %583 = vmatprep.subr.mxu0 0.0
        %584 = vmatpush1.xpose.msra.mxu0 0.0
        %585 = vmatprep.subr.mxu0 0.0
        %586 = vmatpush1.xpose.msra.mxu0 0.0
        %587 = vmatprep.subr.mxu0 0.0
        %588 = vmatpush1.xpose.msra.mxu0 0.0
        %589 = vmatprep.subr.mxu0 0.0
        %590 = vmatpush1.xpose.msra.mxu0 0.0
        %591 = vmatprep.subr.mxu0 0.0
        %592 = vmatpush1.xpose.msra.mxu0 0.0
        %593 = vmatprep.subr.mxu0 0.0
        %594 = vmatpush1.xpose.msra.mxu0 0.0
        %595 = vmatprep.subr.mxu0 0.0
        %596 = vmatpush1.xpose.msra.mxu0 0.0
        %597 = vmatprep.subr.mxu0 0.0
        %598 = vmatpush1.xpose.msra.mxu0 0.0
        %599 = vmatprep.subr.mxu0 0.0
        %600 = vmatpush1.xpose.msra.mxu0 0.0
        %601 = vmatprep.subr.mxu0 0.0
        %602 = vmatpush1.xpose.msra.mxu0 0.0
        %603 = vmatprep.subr.mxu0 0.0
        %604 = vmatpush1.xpose.msra.mxu0 0.0
        %605 = vmatprep.subr.mxu0 0.0
        %606 = vmatpush1.xpose.msra.mxu0 0.0
        %607 = vmatprep.subr.mxu0 0.0
        %608 = vmatpush1.xpose.msra.mxu0 0.0
        %609 = vmatprep.subr.mxu0 0.0
        %610 = vmatpush1.xpose.msra.mxu0 0.0
        %611 = vmatprep.subr.mxu0 0.0
        %612 = vmatpush1.xpose.msra.mxu0 0.0
        %613 = vmatprep.subr.mxu0 0.0
        %614 = vmatpush1.xpose.msra.mxu0 0.0
        %615 = vmatprep.subr.mxu0 0.0
        %616 = vmatpush1.xpose.msra.mxu0 0.0
        %617 = vmatprep.subr.mxu0 0.0
        %618 = vmatpush1.xpose.msra.mxu0 0.0
        %619 = vmatprep.subr.mxu0 0.0
        %620 = vmatpush1.xpose.msra.mxu0 0.0
        %621 = vmatprep.mubr.f32.mxu0 0.0
        %622 = vmatmul.mubr.f32.gmra.mrb[0].mxu0 %v510
        %v623 = vpop.f32.mrb[0].mxu0
        %v624 = vadd.f32 0.0, %v623
        %v625 = vpop.f32.mrb[0].mxu0
        %626 = vmatprep.mubr.f32.mxu0 0.0
        %627 = vmatmul.mubr.f32.gmra.mrb[0].mxu0 %v513
        %v628 = vpop.f32.mrb[0].mxu0
        %v629 = vadd.f32 0.0, %v628
        %v630 = vpop.f32.mrb[0].mxu0
        %631 = vmatprep.mubr.f32.mxu0 0.0
        %632 = vmatmul.mubr.f32.gmra.mrb[0].mxu0 %v516
        %v633 = vpop.f32.mrb[0].mxu0
        %v634 = vadd.f32 0.0, %v633
        %v635 = vpop.f32.mrb[0].mxu0
        %636 = vmatprep.mubr.f32.mxu0 0.0
        %637 = vmatmul.mubr.f32.gmra.mrb[0].mxu0 %v519
        %v638 = vpop.f32.mrb[0].mxu0
        %v639 = vadd.f32 0.0, %v638
        %v640 = vpop.f32.mrb[0].mxu0
        %641 = vmatprep.mubr.f32.mxu0 0.0
        %642 = vmatmul.mubr.f32.gmra.mrb[0].mxu0 %v522
        %v643 = vpop.f32.mrb[0].mxu0
        %v644 = vadd.f32 0.0, %v643
        %v645 = vpop.f32.mrb[0].mxu0
        %646 = vmatprep.mubr.f32.mxu0 0.0
        %647 = vmatmul.mubr.f32.gmra.mrb[0].mxu0 %v525
        %v648 = vpop.f32.mrb[0].mxu0
        %v649 = vadd.f32 0.0, %v648
        %v650 = vpop.f32.mrb[0].mxu0
        %651 = vmatprep.mubr.f32.mxu0 0.0
        %652 = vmatmul.mubr.f32.gmra.mrb[0].mxu0 %v528
        %v653 = vpop.f32.mrb[0].mxu0
        %v654 = vadd.f32 0.0, %v653
        %v655 = vpop.f32.mrb[0].mxu0
        %656 = vmatprep.mubr.f32.mxu0 0.0
        %657 = vmatmul.mubr.f32.gmra.mrb[0].mxu0 %v531
        %v658 = vpop.f32.mrb[0].mxu0
        %v659 = vadd.f32 0.0, %v658
        %v660 = vpop.f32.mrb[0].mxu0
        %661 = vdwg.mxu0
        %v663 = vsel %vm202, %v194, 0
        %v666 = vsel %vm202, %v195, 0
        %v669 = vsel %vm202, %v196, 0
        %v672 = vsel %vm202, %v197, 0
        %v675 = vsel %vm202, %v198, 0
        %v678 = vsel %vm202, %v199, 0
        %v681 = vsel %vm202, %v200, 0
        %v684 = vsel %vm202, %v201, 0
        %v687 = vsel %vm202, %v162, 0
        %v690 = vsel %vm202, %v163, 0
        %v693 = vsel %vm202, %v164, 0
        %v696 = vsel %vm202, %v165, 0
        %v699 = vsel %vm202, %v166, 0
        %v702 = vsel %vm202, %v167, 0
        %v705 = vsel %vm202, %v168, 0
        %v708 = vsel %vm202, %v169, 0
        %710 = vmatprep.subr.mxu0 0.0
        %711 = vmatpush1.xpose.msra.mxu0 %v687
        %712 = vmatprep.subr.mxu0 0.0
        %713 = vmatpush1.xpose.msra.mxu0 %v690
        %714 = vmatprep.subr.mxu0 0.0
        %715 = vmatpush1.xpose.msra.mxu0 %v693
        %716 = vmatprep.subr.mxu0 0.0
        %717 = vmatpush1.xpose.msra.mxu0 %v696
        %718 = vmatprep.subr.mxu0 0.0
        %719 = vmatpush1.xpose.msra.mxu0 %v699
        %720 = vmatprep.subr.mxu0 0.0
        %721 = vmatpush1.xpose.msra.mxu0 %v702
        %722 = vmatprep.subr.mxu0 0.0
        %723 = vmatpush1.xpose.msra.mxu0 %v705
        %724 = vmatprep.subr.mxu0 0.0
        %725 = vmatpush1.xpose.msra.mxu0 %v708
        %726 = vmatprep.subr.mxu0 0.0
        %727 = vmatpush1.xpose.msra.mxu0 0.0
        %728 = vmatprep.subr.mxu0 0.0
        %729 = vmatpush1.xpose.msra.mxu0 0.0
        %730 = vmatprep.subr.mxu0 0.0
        %731 = vmatpush1.xpose.msra.mxu0 0.0
        %732 = vmatprep.subr.mxu0 0.0
        %733 = vmatpush1.xpose.msra.mxu0 0.0
        %734 = vmatprep.subr.mxu0 0.0
        %735 = vmatpush1.xpose.msra.mxu0 0.0
        %736 = vmatprep.subr.mxu0 0.0
        %737 = vmatpush1.xpose.msra.mxu0 0.0
        %738 = vmatprep.subr.mxu0 0.0
        %739 = vmatpush1.xpose.msra.mxu0 0.0
        %740 = vmatprep.subr.mxu0 0.0
        %741 = vmatpush1.xpose.msra.mxu0 0.0
        %742 = vmatprep.subr.mxu0 0.0
        %743 = vmatpush1.xpose.msra.mxu0 0.0
        %744 = vmatprep.subr.mxu0 0.0
        %745 = vmatpush1.xpose.msra.mxu0 0.0
        %746 = vmatprep.subr.mxu0 0.0
        %747 = vmatpush1.xpose.msra.mxu0 0.0
        %748 = vmatprep.subr.mxu0 0.0
        %749 = vmatpush1.xpose.msra.mxu0 0.0
        %750 = vmatprep.subr.mxu0 0.0
        %751 = vmatpush1.xpose.msra.mxu0 0.0
        %752 = vmatprep.subr.mxu0 0.0
        %753 = vmatpush1.xpose.msra.mxu0 0.0
        %754 = vmatprep.subr.mxu0 0.0
        %755 = vmatpush1.xpose.msra.mxu0 0.0
        %756 = vmatprep.subr.mxu0 0.0
        %757 = vmatpush1.xpose.msra.mxu0 0.0
        %758 = vmatprep.subr.mxu0 0.0
        %759 = vmatpush1.xpose.msra.mxu0 0.0
        %760 = vmatprep.subr.mxu0 0.0
        %761 = vmatpush1.xpose.msra.mxu0 0.0
        %762 = vmatprep.subr.mxu0 0.0
        %763 = vmatpush1.xpose.msra.mxu0 0.0
        %764 = vmatprep.subr.mxu0 0.0
        %765 = vmatpush1.xpose.msra.mxu0 0.0
        %766 = vmatprep.subr.mxu0 0.0
        %767 = vmatpush1.xpose.msra.mxu0 0.0
        %768 = vmatprep.subr.mxu0 0.0
        %769 = vmatpush1.xpose.msra.mxu0 0.0
        %770 = vmatprep.subr.mxu0 0.0
        %771 = vmatpush1.xpose.msra.mxu0 0.0
        %772 = vmatprep.subr.mxu0 0.0
        %773 = vmatpush1.xpose.msra.mxu0 0.0
        %774 = vmatprep.mubr.f32.mxu0 0.0
        %775 = vmatmul.mubr.f32.gmra.mrb[0].mxu0 %v663
        %v776 = vpop.f32.mrb[0].mxu0
        %v777 = vadd.f32 0.0, %v776
        %v778 = vpop.f32.mrb[0].mxu0
        %779 = vmatprep.mubr.f32.mxu0 0.0
        %780 = vmatmul.mubr.f32.gmra.mrb[0].mxu0 %v666
        %v781 = vpop.f32.mrb[0].mxu0
        %v782 = vadd.f32 0.0, %v781
        %v783 = vpop.f32.mrb[0].mxu0
        %784 = vmatprep.mubr.f32.mxu0 0.0
        %785 = vmatmul.mubr.f32.gmra.mrb[0].mxu0 %v669
        %v786 = vpop.f32.mrb[0].mxu0
        %v787 = vadd.f32 0.0, %v786
        %v788 = vpop.f32.mrb[0].mxu0
        %789 = vmatprep.mubr.f32.mxu0 0.0
        %790 = vmatmul.mubr.f32.gmra.mrb[0].mxu0 %v672
        %v791 = vpop.f32.mrb[0].mxu0
        %v792 = vadd.f32 0.0, %v791
        %v793 = vpop.f32.mrb[0].mxu0
        %794 = vmatprep.mubr.f32.mxu0 0.0
        %795 = vmatmul.mubr.f32.gmra.mrb[0].mxu0 %v675
        %v796 = vpop.f32.mrb[0].mxu0
        %v797 = vadd.f32 0.0, %v796
        %v798 = vpop.f32.mrb[0].mxu0
        %799 = vmatprep.mubr.f32.mxu0 0.0
        %800 = vmatmul.mubr.f32.gmra.mrb[0].mxu0 %v678
        %v801 = vpop.f32.mrb[0].mxu0
        %v802 = vadd.f32 0.0, %v801
        %v803 = vpop.f32.mrb[0].mxu0
        %804 = vmatprep.mubr.f32.mxu0 0.0
        %805 = vmatmul.mubr.f32.gmra.mrb[0].mxu0 %v681
        %v806 = vpop.f32.mrb[0].mxu0
        %v807 = vadd.f32 0.0, %v806
        %v808 = vpop.f32.mrb[0].mxu0
        %809 = vmatprep.mubr.f32.mxu0 0.0
        %810 = vmatmul.mubr.f32.gmra.mrb[0].mxu0 %v684
        %v811 = vpop.f32.mrb[0].mxu0
        %v812 = vadd.f32 0.0, %v811
        %v813 = vpop.f32.mrb[0].mxu0
        %814 = vdwg.mxu0
        %v815 = vsel %vm202, %v318, -inf
        %816 = vmax.xlane.f32.xlu0 %v815
        %v817 = vpop.xlane.xlu0 %816
        %v818 = vsel %vm202, %v323, -inf
        %819 = vmax.xlane.f32.xlu0 %v818
        %v820 = vpop.xlane.xlu0 %819
        %v821 = vsel %vm202, %v328, -inf
        %822 = vmax.xlane.f32.xlu0 %v821
        %v823 = vpop.xlane.xlu0 %822
        %v824 = vsel %vm202, %v333, -inf
        %825 = vmax.xlane.f32.xlu0 %v824
        %v826 = vpop.xlane.xlu0 %825
        %v827 = vsel %vm202, %v338, -inf
        %828 = vmax.xlane.f32.xlu0 %v827
        %v829 = vpop.xlane.xlu0 %828
        %v830 = vsel %vm202, %v343, -inf
        %831 = vmax.xlane.f32.xlu0 %v830
        %v832 = vpop.xlane.xlu0 %831
        %v833 = vsel %vm202, %v348, -inf
        %834 = vmax.xlane.f32.xlu0 %v833
        %v835 = vpop.xlane.xlu0 %834
        %v836 = vsel %vm202, %v353, -inf
        %837 = vmax.xlane.f32.xlu0 %v836
        %v838 = vpop.xlane.xlu0 %837
        %v839 = vsel %vm202, %v471, -inf
        %840 = vmax.xlane.f32.xlu0 %v839
        %v841 = vpop.xlane.xlu0 %840
        %v842 = vsel %vm202, %v476, -inf
        %843 = vmax.xlane.f32.xlu0 %v842
        %v844 = vpop.xlane.xlu0 %843
        %v845 = vsel %vm202, %v481, -inf
        %846 = vmax.xlane.f32.xlu0 %v845
        %v847 = vpop.xlane.xlu0 %846
        %v848 = vsel %vm202, %v486, -inf
        %849 = vmax.xlane.f32.xlu0 %v848
        %v850 = vpop.xlane.xlu0 %849
        %v851 = vsel %vm202, %v491, -inf
        %852 = vmax.xlane.f32.xlu0 %v851
        %v853 = vpop.xlane.xlu0 %852
        %v854 = vsel %vm202, %v496, -inf
        %855 = vmax.xlane.f32.xlu0 %v854
        %v856 = vpop.xlane.xlu0 %855
        %v857 = vsel %vm202, %v501, -inf
        %858 = vmax.xlane.f32.xlu0 %v857
        %v859 = vpop.xlane.xlu0 %858
        %v860 = vsel %vm202, %v506, -inf
        %861 = vmax.xlane.f32.xlu0 %v860
        %v862 = vpop.xlane.xlu0 %861
        %v863 = vsel %vm202, %v624, -inf
        %864 = vmax.xlane.f32.xlu0 %v863
        %v865 = vpop.xlane.xlu0 %864
        %v866 = vsel %vm202, %v629, -inf
        %867 = vmax.xlane.f32.xlu0 %v866
        %v868 = vpop.xlane.xlu0 %867
        %v869 = vsel %vm202, %v634, -inf
        %870 = vmax.xlane.f32.xlu0 %v869
        %v871 = vpop.xlane.xlu0 %870
        %v872 = vsel %vm202, %v639, -inf
        %873 = vmax.xlane.f32.xlu0 %v872
        %v874 = vpop.xlane.xlu0 %873
        %v875 = vsel %vm202, %v644, -inf
        %876 = vmax.xlane.f32.xlu0 %v875
        %v877 = vpop.xlane.xlu0 %876
        %v878 = vsel %vm202, %v649, -inf
        %879 = vmax.xlane.f32.xlu0 %v878
        %v880 = vpop.xlane.xlu0 %879
        %v881 = vsel %vm202, %v654, -inf
        %882 = vmax.xlane.f32.xlu0 %v881
        %v883 = vpop.xlane.xlu0 %882
        %v884 = vsel %vm202, %v659, -inf
        %885 = vmax.xlane.f32.xlu0 %v884
        %v886 = vpop.xlane.xlu0 %885
        %v887 = vsel %vm202, %v777, -inf
        %888 = vmax.xlane.f32.xlu0 %v887
        %v889 = vpop.xlane.xlu0 %888
        %v890 = vsel %vm202, %v782, -inf
        %891 = vmax.xlane.f32.xlu0 %v890
        %v892 = vpop.xlane.xlu0 %891
        %v893 = vsel %vm202, %v787, -inf
        %894 = vmax.xlane.f32.xlu0 %v893
        %v895 = vpop.xlane.xlu0 %894
        %v896 = vsel %vm202, %v792, -inf
        %897 = vmax.xlane.f32.xlu0 %v896
        %v898 = vpop.xlane.xlu0 %897
        %v899 = vsel %vm202, %v797, -inf
        %900 = vmax.xlane.f32.xlu0 %v899
        %v901 = vpop.xlane.xlu0 %900
        %v902 = vsel %vm202, %v802, -inf
        %903 = vmax.xlane.f32.xlu0 %v902
        %v904 = vpop.xlane.xlu0 %903
        %v905 = vsel %vm202, %v807, -inf
        %906 = vmax.xlane.f32.xlu0 %v905
        %v907 = vpop.xlane.xlu0 %906
        %v908 = vsel %vm202, %v812, -inf
        %909 = vmax.xlane.f32.xlu0 %v908
        %v910 = vpop.xlane.xlu0 %909
        %v911 = vsub.f32 %v318, %v817
        %v912 = vsub.f32 %v323, %v820
        %v913 = vsub.f32 %v328, %v823
        %v914 = vsub.f32 %v333, %v826
        %v915 = vsub.f32 %v338, %v829
        %v916 = vsub.f32 %v343, %v832
        %v917 = vsub.f32 %v348, %v835
        %v918 = vsub.f32 %v353, %v838
        %v919 = vsub.f32 %v471, %v841
        %v920 = vsub.f32 %v476, %v844
        %v921 = vsub.f32 %v481, %v847
        %v922 = vsub.f32 %v486, %v850
        %v923 = vsub.f32 %v491, %v853
        %v924 = vsub.f32 %v496, %v856
        %v925 = vsub.f32 %v501, %v859
        %v926 = vsub.f32 %v506, %v862
        %v927 = vsub.f32 %v624, %v865
        %v928 = vsub.f32 %v629, %v868
        %v929 = vsub.f32 %v634, %v871
        %v930 = vsub.f32 %v639, %v874
        %v931 = vsub.f32 %v644, %v877
        %v932 = vsub.f32 %v649, %v880
        %v933 = vsub.f32 %v654, %v883
        %v934 = vsub.f32 %v659, %v886
        %v935 = vsub.f32 %v777, %v889
        %v936 = vsub.f32 %v782, %v892
        %v937 = vsub.f32 %v787, %v895
        %v938 = vsub.f32 %v792, %v898
        %v939 = vsub.f32 %v797, %v901
        %v940 = vsub.f32 %v802, %v904
        %v941 = vsub.f32 %v807, %v907
        %v942 = vsub.f32 %v812, %v910
        %v943 = vmul.f32 %v911, 1.442695
        %v944 = vpow.pop %v943
        %v945 = vmul.f32 %v912, 1.442695
        %v946 = vpow.pop %v945
        %v947 = vmul.f32 %v913, 1.442695
        %v948 = vpow.pop %v947
        %v949 = vmul.f32 %v914, 1.442695
        %v950 = vpow.pop %v949
        %v951 = vmul.f32 %v915, 1.442695
        %v952 = vpow.pop %v951
        %v953 = vmul.f32 %v916, 1.442695
        %v954 = vpow.pop %v953
        %v955 = vmul.f32 %v917, 1.442695
        %v956 = vpow.pop %v955
        %v957 = vmul.f32 %v918, 1.442695
        %v958 = vpow.pop %v957
        %v959 = vmul.f32 %v919, 1.442695
        %v960 = vpow.pop %v959
        %v961 = vmul.f32 %v920, 1.442695
        %v962 = vpow.pop %v961
        %v963 = vmul.f32 %v921, 1.442695
        %v964 = vpow.pop %v963
        %v965 = vmul.f32 %v922, 1.442695
        %v966 = vpow.pop %v965
        %v967 = vmul.f32 %v923, 1.442695
        %v968 = vpow.pop %v967
        %v969 = vmul.f32 %v924, 1.442695
        %v970 = vpow.pop %v969
        %v971 = vmul.f32 %v925, 1.442695
        %v972 = vpow.pop %v971
        %v973 = vmul.f32 %v926, 1.442695
        %v974 = vpow.pop %v973
        %v975 = vmul.f32 %v927, 1.442695
        %v976 = vpow.pop %v975
        %v977 = vmul.f32 %v928, 1.442695
        %v978 = vpow.pop %v977
        %v979 = vmul.f32 %v929, 1.442695
        %v980 = vpow.pop %v979
        %v981 = vmul.f32 %v930, 1.442695
        %v982 = vpow.pop %v981
        %v983 = vmul.f32 %v931, 1.442695
        %v984 = vpow.pop %v983
        %v985 = vmul.f32 %v932, 1.442695
        %v986 = vpow.pop %v985
        %v987 = vmul.f32 %v933, 1.442695
        %v988 = vpow.pop %v987
        %v989 = vmul.f32 %v934, 1.442695
        %v990 = vpow.pop %v989
        %v991 = vmul.f32 %v935, 1.442695
        %v992 = vpow.pop %v991
        %v993 = vmul.f32 %v936, 1.442695
        %v994 = vpow.pop %v993
        %v995 = vmul.f32 %v937, 1.442695
        %v996 = vpow.pop %v995
        %v997 = vmul.f32 %v938, 1.442695
        %v998 = vpow.pop %v997
        %v999 = vmul.f32 %v939, 1.442695
        %v1000 = vpow.pop %v999
        %v1001 = vmul.f32 %v940, 1.442695
        %v1002 = vpow.pop %v1001
        %v1003 = vmul.f32 %v941, 1.442695
        %v1004 = vpow.pop %v1003
        %v1005 = vmul.f32 %v942, 1.442695
        %v1006 = vpow.pop %v1005
        %v1007 = vsel %vm202, %v944, 0.0
        %1008 = vadd.xlane.f32.xlu0 %v1007
        %v1009 = vpop.xlane.xlu0 %1008
        %v1010 = vsel %vm202, %v946, 0.0
        %1011 = vadd.xlane.f32.xlu0 %v1010
        %v1012 = vpop.xlane.xlu0 %1011
        %v1013 = vsel %vm202, %v948, 0.0
        %1014 = vadd.xlane.f32.xlu0 %v1013
        %v1015 = vpop.xlane.xlu0 %1014
        %v1016 = vsel %vm202, %v950, 0.0
        %1017 = vadd.xlane.f32.xlu0 %v1016
        %v1018 = vpop.xlane.xlu0 %1017
        %v1019 = vsel %vm202, %v952, 0.0
        %1020 = vadd.xlane.f32.xlu0 %v1019
        %v1021 = vpop.xlane.xlu0 %1020
        %v1022 = vsel %vm202, %v954, 0.0
        %1023 = vadd.xlane.f32.xlu0 %v1022
        %v1024 = vpop.xlane.xlu0 %1023
        %v1025 = vsel %vm202, %v956, 0.0
        %1026 = vadd.xlane.f32.xlu0 %v1025
        %v1027 = vpop.xlane.xlu0 %1026
        %v1028 = vsel %vm202, %v958, 0.0
        %1029 = vadd.xlane.f32.xlu0 %v1028
        %v1030 = vpop.xlane.xlu0 %1029
        %v1031 = vsel %vm202, %v960, 0.0
        %1032 = vadd.xlane.f32.xlu0 %v1031
        %v1033 = vpop.xlane.xlu0 %1032
        %v1034 = vsel %vm202, %v962, 0.0
        %1035 = vadd.xlane.f32.xlu0 %v1034
        %v1036 = vpop.xlane.xlu0 %1035
        %v1037 = vsel %vm202, %v964, 0.0
        %1038 = vadd.xlane.f32.xlu0 %v1037
        %v1039 = vpop.xlane.xlu0 %1038
        %v1040 = vsel %vm202, %v966, 0.0
        %1041 = vadd.xlane.f32.xlu0 %v1040
        %v1042 = vpop.xlane.xlu0 %1041
        %v1043 = vsel %vm202, %v968, 0.0
        %1044 = vadd.xlane.f32.xlu0 %v1043
        %v1045 = vpop.xlane.xlu0 %1044
        %v1046 = vsel %vm202, %v970, 0.0
        %1047 = vadd.xlane.f32.xlu0 %v1046
        %v1048 = vpop.xlane.xlu0 %1047
        %v1049 = vsel %vm202, %v972, 0.0
        %1050 = vadd.xlane.f32.xlu0 %v1049
        %v1051 = vpop.xlane.xlu0 %1050
        %v1052 = vsel %vm202, %v974, 0.0
        %1053 = vadd.xlane.f32.xlu0 %v1052
        %v1054 = vpop.xlane.xlu0 %1053
        %v1055 = vsel %vm202, %v976, 0.0
        %1056 = vadd.xlane.f32.xlu0 %v1055
        %v1057 = vpop.xlane.xlu0 %1056
        %v1058 = vsel %vm202, %v978, 0.0
        %1059 = vadd.xlane.f32.xlu0 %v1058
        %v1060 = vpop.xlane.xlu0 %1059
        %v1061 = vsel %vm202, %v980, 0.0
        %1062 = vadd.xlane.f32.xlu0 %v1061
        %v1063 = vpop.xlane.xlu0 %1062
        %v1064 = vsel %vm202, %v982, 0.0
        %1065 = vadd.xlane.f32.xlu0 %v1064
        %v1066 = vpop.xlane.xlu0 %1065
        %v1067 = vsel %vm202, %v984, 0.0
        %1068 = vadd.xlane.f32.xlu0 %v1067
        %v1069 = vpop.xlane.xlu0 %1068
        %v1070 = vsel %vm202, %v986, 0.0
        %1071 = vadd.xlane.f32.xlu0 %v1070
        %v1072 = vpop.xlane.xlu0 %1071
        %v1073 = vsel %vm202, %v988, 0.0
        %1074 = vadd.xlane.f32.xlu0 %v1073
        %v1075 = vpop.xlane.xlu0 %1074
        %v1076 = vsel %vm202, %v990, 0.0
        %1077 = vadd.xlane.f32.xlu0 %v1076
        %v1078 = vpop.xlane.xlu0 %1077
        %v1079 = vsel %vm202, %v992, 0.0
        %1080 = vadd.xlane.f32.xlu0 %v1079
        %v1081 = vpop.xlane.xlu0 %1080
        %v1082 = vsel %vm202, %v994, 0.0
        %1083 = vadd.xlane.f32.xlu0 %v1082
        %v1084 = vpop.xlane.xlu0 %1083
        %v1085 = vsel %vm202, %v996, 0.0
        %1086 = vadd.xlane.f32.xlu0 %v1085
        %v1087 = vpop.xlane.xlu0 %1086
        %v1088 = vsel %vm202, %v998, 0.0
        %1089 = vadd.xlane.f32.xlu0 %v1088
        %v1090 = vpop.xlane.xlu0 %1089
        %v1091 = vsel %vm202, %v1000, 0.0
        %1092 = vadd.xlane.f32.xlu0 %v1091
        %v1093 = vpop.xlane.xlu0 %1092
        %v1094 = vsel %vm202, %v1002, 0.0
        %1095 = vadd.xlane.f32.xlu0 %v1094
        %v1096 = vpop.xlane.xlu0 %1095
        %v1097 = vsel %vm202, %v1004, 0.0
        %1098 = vadd.xlane.f32.xlu0 %v1097
        %v1099 = vpop.xlane.xlu0 %1098
        %v1100 = vsel %vm202, %v1006, 0.0
        %1101 = vadd.xlane.f32.xlu0 %v1100
        %v1102 = vpop.xlane.xlu0 %1101
        %v1103 = vrcp.pop %v1009
        %v1104 = vrcp.pop %v1012
        %v1105 = vrcp.pop %v1015
        %v1106 = vrcp.pop %v1018
        %v1107 = vrcp.pop %v1021
        %v1108 = vrcp.pop %v1024
        %v1109 = vrcp.pop %v1027
        %v1110 = vrcp.pop %v1030
        %v1111 = vrcp.pop %v1033
        %v1112 = vrcp.pop %v1036
        %v1113 = vrcp.pop %v1039
        %v1114 = vrcp.pop %v1042
        %v1115 = vrcp.pop %v1045
        %v1116 = vrcp.pop %v1048
        %v1117 = vrcp.pop %v1051
        %v1118 = vrcp.pop %v1054
        %v1119 = vrcp.pop %v1057
        %v1120 = vrcp.pop %v1060
        %v1121 = vrcp.pop %v1063
        %v1122 = vrcp.pop %v1066
        %v1123 = vrcp.pop %v1069
        %v1124 = vrcp.pop %v1072
        %v1125 = vrcp.pop %v1075
        %v1126 = vrcp.pop %v1078
        %v1127 = vrcp.pop %v1081
        %v1128 = vrcp.pop %v1084
        %v1129 = vrcp.pop %v1087
        %v1130 = vrcp.pop %v1090
        %v1131 = vrcp.pop %v1093
        %v1132 = vrcp.pop %v1096
        %v1133 = vrcp.pop %v1099
        %v1134 = vrcp.pop %v1102
        %v1135 = vmul.f32 %v1009, %v1103
        %v1136 = vmul.f32 %v1012, %v1104
        %v1137 = vmul.f32 %v1015, %v1105
        %v1138 = vmul.f32 %v1018, %v1106
        %v1139 = vmul.f32 %v1021, %v1107
        %v1140 = vmul.f32 %v1024, %v1108
        %v1141 = vmul.f32 %v1027, %v1109
        %v1142 = vmul.f32 %v1030, %v1110
        %v1143 = vmul.f32 %v1033, %v1111
        %v1144 = vmul.f32 %v1036, %v1112
        %v1145 = vmul.f32 %v1039, %v1113
        %v1146 = vmul.f32 %v1042, %v1114
        %v1147 = vmul.f32 %v1045, %v1115
        %v1148 = vmul.f32 %v1048, %v1116
        %v1149 = vmul.f32 %v1051, %v1117
        %v1150 = vmul.f32 %v1054, %v1118
        %v1151 = vmul.f32 %v1057, %v1119
        %v1152 = vmul.f32 %v1060, %v1120
        %v1153 = vmul.f32 %v1063, %v1121
        %v1154 = vmul.f32 %v1066, %v1122
        %v1155 = vmul.f32 %v1069, %v1123
        %v1156 = vmul.f32 %v1072, %v1124
        %v1157 = vmul.f32 %v1075, %v1125
        %v1158 = vmul.f32 %v1078, %v1126
        %v1159 = vmul.f32 %v1081, %v1127
        %v1160 = vmul.f32 %v1084, %v1128
        %v1161 = vmul.f32 %v1087, %v1129
        %v1162 = vmul.f32 %v1090, %v1130
        %v1163 = vmul.f32 %v1093, %v1131
        %v1164 = vmul.f32 %v1096, %v1132
        %v1165 = vmul.f32 %v1099, %v1133
        %v1166 = vmul.f32 %v1102, %v1134
        %v1167 = vsub.f32 2.0, %v1135
        %v1168 = vsub.f32 2.0, %v1136
        %v1169 = vsub.f32 2.0, %v1137
        %v1170 = vsub.f32 2.0, %v1138
        %v1171 = vsub.f32 2.0, %v1139
        %v1172 = vsub.f32 2.0, %v1140
        %v1173 = vsub.f32 2.0, %v1141
        %v1174 = vsub.f32 2.0, %v1142
        %v1175 = vsub.f32 2.0, %v1143
        %v1176 = vsub.f32 2.0, %v1144
        %v1177 = vsub.f32 2.0, %v1145
        %v1178 = vsub.f32 2.0, %v1146
        %v1179 = vsub.f32 2.0, %v1147
        %v1180 = vsub.f32 2.0, %v1148
        %v1181 = vsub.f32 2.0, %v1149
        %v1182 = vsub.f32 2.0, %v1150
        %v1183 = vsub.f32 2.0, %v1151
        %v1184 = vsub.f32 2.0, %v1152
        %v1185 = vsub.f32 2.0, %v1153
        %v1186 = vsub.f32 2.0, %v1154
        %v1187 = vsub.f32 2.0, %v1155
        %v1188 = vsub.f32 2.0, %v1156
        %v1189 = vsub.f32 2.0, %v1157
        %v1190 = vsub.f32 2.0, %v1158
        %v1191 = vsub.f32 2.0, %v1159
        %v1192 = vsub.f32 2.0, %v1160
        %v1193 = vsub.f32 2.0, %v1161
        %v1194 = vsub.f32 2.0, %v1162
        %v1195 = vsub.f32 2.0, %v1163
        %v1196 = vsub.f32 2.0, %v1164
        %v1197 = vsub.f32 2.0, %v1165
        %v1198 = vsub.f32 2.0, %v1166
        %v1199 = vmul.f32 %v1103, %v1167
        %v1200 = vmul.f32 %v1104, %v1168
        %v1201 = vmul.f32 %v1105, %v1169
        %v1202 = vmul.f32 %v1106, %v1170
        %v1203 = vmul.f32 %v1107, %v1171
        %v1204 = vmul.f32 %v1108, %v1172
        %v1205 = vmul.f32 %v1109, %v1173
        %v1206 = vmul.f32 %v1110, %v1174
        %v1207 = vmul.f32 %v1111, %v1175
        %v1208 = vmul.f32 %v1112, %v1176
        %v1209 = vmul.f32 %v1113, %v1177
        %v1210 = vmul.f32 %v1114, %v1178
        %v1211 = vmul.f32 %v1115, %v1179
        %v1212 = vmul.f32 %v1116, %v1180
        %v1213 = vmul.f32 %v1117, %v1181
        %v1214 = vmul.f32 %v1118, %v1182
        %v1215 = vmul.f32 %v1119, %v1183
        %v1216 = vmul.f32 %v1120, %v1184
        %v1217 = vmul.f32 %v1121, %v1185
        %v1218 = vmul.f32 %v1122, %v1186
        %v1219 = vmul.f32 %v1123, %v1187
        %v1220 = vmul.f32 %v1124, %v1188
        %v1221 = vmul.f32 %v1125, %v1189
        %v1222 = vmul.f32 %v1126, %v1190
        %v1223 = vmul.f32 %v1127, %v1191
        %v1224 = vmul.f32 %v1128, %v1192
        %v1225 = vmul.f32 %v1129, %v1193
        %v1226 = vmul.f32 %v1130, %v1194
        %v1227 = vmul.f32 %v1131, %v1195
        %v1228 = vmul.f32 %v1132, %v1196
        %v1229 = vmul.f32 %v1133, %v1197
        %v1230 = vmul.f32 %v1134, %v1198
        %v1231 = vmul.f32 %v944, %v1199
        %v1232 = vmul.f32 %v946, %v1200
        %v1233 = vmul.f32 %v948, %v1201
        %v1234 = vmul.f32 %v950, %v1202
        %v1235 = vmul.f32 %v952, %v1203
        %v1236 = vmul.f32 %v954, %v1204
        %v1237 = vmul.f32 %v956, %v1205
        %v1238 = vmul.f32 %v958, %v1206
        %v1239 = vmul.f32 %v960, %v1207
        %v1240 = vmul.f32 %v962, %v1208
        %v1241 = vmul.f32 %v964, %v1209
        %v1242 = vmul.f32 %v966, %v1210
        %v1243 = vmul.f32 %v968, %v1211
        %v1244 = vmul.f32 %v970, %v1212
        %v1245 = vmul.f32 %v972, %v1213
        %v1246 = vmul.f32 %v974, %v1214
        %v1247 = vmul.f32 %v976, %v1215
        %v1248 = vmul.f32 %v978, %v1216
        %v1249 = vmul.f32 %v980, %v1217
        %v1250 = vmul.f32 %v982, %v1218
        %v1251 = vmul.f32 %v984, %v1219
        %v1252 = vmul.f32 %v986, %v1220
        %v1253 = vmul.f32 %v988, %v1221
        %v1254 = vmul.f32 %v990, %v1222
        %v1255 = vmul.f32 %v992, %v1223
        %v1256 = vmul.f32 %v994, %v1224
        %v1257 = vmul.f32 %v996, %v1225
        %v1258 = vmul.f32 %v998, %v1226
        %v1259 = vmul.f32 %v1000, %v1227
        %v1260 = vmul.f32 %v1002, %v1228
        %v1261 = vmul.f32 %v1004, %v1229
        %v1262 = vmul.f32 %v1006, %v1230
        %v1264 = vsel %vm202, %v1231, 0
        %v1267 = vsel %vm202, %v1232, 0
        %v1270 = vsel %vm202, %v1233, 0
        %v1273 = vsel %vm202, %v1234, 0
        %v1276 = vsel %vm202, %v1235, 0
        %v1279 = vsel %vm202, %v1236, 0
        %v1282 = vsel %vm202, %v1237, 0
        %v1285 = vsel %vm202, %v1238, 0
        %1287 = vmatprep.subr.mxu0 0.0
        %1288 = vmatpush1.msra.mxu0 %v138
        %1289 = vmatprep.subr.mxu0 0.0
        %1290 = vmatpush1.msra.mxu0 %v139
        %1291 = vmatprep.subr.mxu0 0.0
        %1292 = vmatpush1.msra.mxu0 %v140
        %1293 = vmatprep.subr.mxu0 0.0
        %1294 = vmatpush1.msra.mxu0 %v141
        %1295 = vmatprep.subr.mxu0 0.0
        %1296 = vmatpush1.msra.mxu0 %v142
        %1297 = vmatprep.subr.mxu0 0.0
        %1298 = vmatpush1.msra.mxu0 %v143
        %1299 = vmatprep.subr.mxu0 0.0
        %1300 = vmatpush1.msra.mxu0 %v144
        %1301 = vmatprep.subr.mxu0 0.0
        %1302 = vmatpush1.msra.mxu0 %v145
        %1303 = vmatprep.subr.mxu0 0.0
        %1304 = vmatpush1.msra.mxu0 0.0
        %1305 = vmatprep.subr.mxu0 0.0
        %1306 = vmatpush1.msra.mxu0 0.0
        %1307 = vmatprep.subr.mxu0 0.0
        %1308 = vmatpush1.msra.mxu0 0.0
        %1309 = vmatprep.subr.mxu0 0.0
        %1310 = vmatpush1.msra.mxu0 0.0
        %1311 = vmatprep.subr.mxu0 0.0
        %1312 = vmatpush1.msra.mxu0 0.0
        %1313 = vmatprep.subr.mxu0 0.0
        %1314 = vmatpush1.msra.mxu0 0.0
        %1315 = vmatprep.subr.mxu0 0.0
        %1316 = vmatpush1.msra.mxu0 0.0
        %1317 = vmatprep.subr.mxu0 0.0
        %1318 = vmatpush1.msra.mxu0 0.0
        %1319 = vmatprep.subr.mxu0 0.0
        %1320 = vmatpush1.msra.mxu0 0.0
        %1321 = vmatprep.subr.mxu0 0.0
        %1322 = vmatpush1.msra.mxu0 0.0
        %1323 = vmatprep.subr.mxu0 0.0
        %1324 = vmatpush1.msra.mxu0 0.0
        %1325 = vmatprep.subr.mxu0 0.0
        %1326 = vmatpush1.msra.mxu0 0.0
        %1327 = vmatprep.subr.mxu0 0.0
        %1328 = vmatpush1.msra.mxu0 0.0
        %1329 = vmatprep.subr.mxu0 0.0
        %1330 = vmatpush1.msra.mxu0 0.0
        %1331 = vmatprep.subr.mxu0 0.0
        %1332 = vmatpush1.msra.mxu0 0.0
        %1333 = vmatprep.subr.mxu0 0.0
        %1334 = vmatpush1.msra.mxu0 0.0
        %1335 = vmatprep.subr.mxu0 0.0
        %1336 = vmatpush1.msra.mxu0 0.0
        %1337 = vmatprep.subr.mxu0 0.0
        %1338 = vmatpush1.msra.mxu0 0.0
        %1339 = vmatprep.subr.mxu0 0.0
        %1340 = vmatpush1.msra.mxu0 0.0
        %1341 = vmatprep.subr.mxu0 0.0
        %1342 = vmatpush1.msra.mxu0 0.0
        %1343 = vmatprep.subr.mxu0 0.0
        %1344 = vmatpush1.msra.mxu0 0.0
        %1345 = vmatprep.subr.mxu0 0.0
        %1346 = vmatpush1.msra.mxu0 0.0
        %1347 = vmatprep.subr.mxu0 0.0
        %1348 = vmatpush1.msra.mxu0 0.0
        %1349 = vmatprep.subr.mxu0 0.0
        %1350 = vmatpush1.msra.mxu0 0.0
        %1351 = vmatprep.mubr.f32.mxu0 0.0
        %1352 = vmatmul.mubr.f32.gmra.mrb[0].mxu0 %v1264
        %v1353 = vpop.f32.mrb[0].mxu0
        %v1354 = vadd.f32 0.0, %v1353
        %v1355 = vpop.f32.mrb[0].mxu0
        %1356 = vmatprep.mubr.f32.mxu0 0.0
        %1357 = vmatmul.mubr.f32.gmra.mrb[0].mxu0 %v1267
        %v1358 = vpop.f32.mrb[0].mxu0
        %v1359 = vadd.f32 0.0, %v1358
        %v1360 = vpop.f32.mrb[0].mxu0
        %1361 = vmatprep.mubr.f32.mxu0 0.0
        %1362 = vmatmul.mubr.f32.gmra.mrb[0].mxu0 %v1270
        %v1363 = vpop.f32.mrb[0].mxu0
        %v1364 = vadd.f32 0.0, %v1363
        %v1365 = vpop.f32.mrb[0].mxu0
        %1366 = vmatprep.mubr.f32.mxu0 0.0
        %1367 = vmatmul.mubr.f32.gmra.mrb[0].mxu0 %v1273
        %v1368 = vpop.f32.mrb[0].mxu0
        %v1369 = vadd.f32 0.0, %v1368
        %v1370 = vpop.f32.mrb[0].mxu0
        %1371 = vmatprep.mubr.f32.mxu0 0.0
        %1372 = vmatmul.mubr.f32.gmra.mrb[0].mxu0 %v1276
        %v1373 = vpop.f32.mrb[0].mxu0
        %v1374 = vadd.f32 0.0, %v1373
        %v1375 = vpop.f32.mrb[0].mxu0
        %1376 = vmatprep.mubr.f32.mxu0 0.0
        %1377 = vmatmul.mubr.f32.gmra.mrb[0].mxu0 %v1279
        %v1378 = vpop.f32.mrb[0].mxu0
        %v1379 = vadd.f32 0.0, %v1378
        %v1380 = vpop.f32.mrb[0].mxu0
        %1381 = vmatprep.mubr.f32.mxu0 0.0
        %1382 = vmatmul.mubr.f32.gmra.mrb[0].mxu0 %v1282
        %v1383 = vpop.f32.mrb[0].mxu0
        %v1384 = vadd.f32 0.0, %v1383
        %v1385 = vpop.f32.mrb[0].mxu0
        %1386 = vmatprep.mubr.f32.mxu0 0.0
        %1387 = vmatmul.mubr.f32.gmra.mrb[0].mxu0 %v1285
        %v1388 = vpop.f32.mrb[0].mxu0
        %v1389 = vadd.f32 0.0, %v1388
        %v1390 = vpop.f32.mrb[0].mxu0
        %1391 = vdwg.mxu0
        %v1393 = vsel %vm202, %v1239, 0
        %v1396 = vsel %vm202, %v1240, 0
        %v1399 = vsel %vm202, %v1241, 0
        %v1402 = vsel %vm202, %v1242, 0
        %v1405 = vsel %vm202, %v1243, 0
        %v1408 = vsel %vm202, %v1244, 0
        %v1411 = vsel %vm202, %v1245, 0
        %v1414 = vsel %vm202, %v1246, 0
        %1416 = vmatprep.subr.mxu0 0.0
        %1417 = vmatpush1.msra.mxu0 %v146
        %1418 = vmatprep.subr.mxu0 0.0
        %1419 = vmatpush1.msra.mxu0 %v147
        %1420 = vmatprep.subr.mxu0 0.0
        %1421 = vmatpush1.msra.mxu0 %v148
        %1422 = vmatprep.subr.mxu0 0.0
        %1423 = vmatpush1.msra.mxu0 %v149
        %1424 = vmatprep.subr.mxu0 0.0
        %1425 = vmatpush1.msra.mxu0 %v150
        %1426 = vmatprep.subr.mxu0 0.0
        %1427 = vmatpush1.msra.mxu0 %v151
        %1428 = vmatprep.subr.mxu0 0.0
        %1429 = vmatpush1.msra.mxu0 %v152
        %1430 = vmatprep.subr.mxu0 0.0
        %1431 = vmatpush1.msra.mxu0 %v153
        %1432 = vmatprep.subr.mxu0 0.0
        %1433 = vmatpush1.msra.mxu0 0.0
        %1434 = vmatprep.subr.mxu0 0.0
        %1435 = vmatpush1.msra.mxu0 0.0
        %1436 = vmatprep.subr.mxu0 0.0
        %1437 = vmatpush1.msra.mxu0 0.0
        %1438 = vmatprep.subr.mxu0 0.0
        %1439 = vmatpush1.msra.mxu0 0.0
        %1440 = vmatprep.subr.mxu0 0.0
        %1441 = vmatpush1.msra.mxu0 0.0
        %1442 = vmatprep.subr.mxu0 0.0
        %1443 = vmatpush1.msra.mxu0 0.0
        %1444 = vmatprep.subr.mxu0 0.0
        %1445 = vmatpush1.msra.mxu0 0.0
        %1446 = vmatprep.subr.mxu0 0.0
        %1447 = vmatpush1.msra.mxu0 0.0
        %1448 = vmatprep.subr.mxu0 0.0
        %1449 = vmatpush1.msra.mxu0 0.0
        %1450 = vmatprep.subr.mxu0 0.0
        %1451 = vmatpush1.msra.mxu0 0.0
        %1452 = vmatprep.subr.mxu0 0.0
        %1453 = vmatpush1.msra.mxu0 0.0
        %1454 = vmatprep.subr.mxu0 0.0
        %1455 = vmatpush1.msra.mxu0 0.0
        %1456 = vmatprep.subr.mxu0 0.0
        %1457 = vmatpush1.msra.mxu0 0.0
        %1458 = vmatprep.subr.mxu0 0.0
        %1459 = vmatpush1.msra.mxu0 0.0
        %1460 = vmatprep.subr.mxu0 0.0
        %1461 = vmatpush1.msra.mxu0 0.0
        %1462 = vmatprep.subr.mxu0 0.0
        %1463 = vmatpush1.msra.mxu0 0.0
        %1464 = vmatprep.subr.mxu0 0.0
        %1465 = vmatpush1.msra.mxu0 0.0
        %1466 = vmatprep.subr.mxu0 0.0
        %1467 = vmatpush1.msra.mxu0 0.0
        %1468 = vmatprep.subr.mxu0 0.0
        %1469 = vmatpush1.msra.mxu0 0.0
        %1470 = vmatprep.subr.mxu0 0.0
        %1471 = vmatpush1.msra.mxu0 0.0
        %1472 = vmatprep.subr.mxu0 0.0
        %1473 = vmatpush1.msra.mxu0 0.0
        %1474 = vmatprep.subr.mxu0 0.0
        %1475 = vmatpush1.msra.mxu0 0.0
        %1476 = vmatprep.subr.mxu0 0.0
        %1477 = vmatpush1.msra.mxu0 0.0
        %1478 = vmatprep.subr.mxu0 0.0
        %1479 = vmatpush1.msra.mxu0 0.0
        %1480 = vmatprep.mubr.f32.mxu0 0.0
        %1481 = vmatmul.mubr.f32.gmra.mrb[0].mxu0 %v1393
        %v1482 = vpop.f32.mrb[0].mxu0
        %v1483 = vadd.f32 0.0, %v1482
        %v1484 = vpop.f32.mrb[0].mxu0
        %1485 = vmatprep.mubr.f32.mxu0 0.0
        %1486 = vmatmul.mubr.f32.gmra.mrb[0].mxu0 %v1396
        %v1487 = vpop.f32.mrb[0].mxu0
        %v1488 = vadd.f32 0.0, %v1487
        %v1489 = vpop.f32.mrb[0].mxu0
        %1490 = vmatprep.mubr.f32.mxu0 0.0
        %1491 = vmatmul.mubr.f32.gmra.mrb[0].mxu0 %v1399
        %v1492 = vpop.f32.mrb[0].mxu0
        %v1493 = vadd.f32 0.0, %v1492
        %v1494 = vpop.f32.mrb[0].mxu0
        %1495 = vmatprep.mubr.f32.mxu0 0.0
        %1496 = vmatmul.mubr.f32.gmra.mrb[0].mxu0 %v1402
        %v1497 = vpop.f32.mrb[0].mxu0
        %v1498 = vadd.f32 0.0, %v1497
        %v1499 = vpop.f32.mrb[0].mxu0
        %1500 = vmatprep.mubr.f32.mxu0 0.0
        %1501 = vmatmul.mubr.f32.gmra.mrb[0].mxu0 %v1405
        %v1502 = vpop.f32.mrb[0].mxu0
        %v1503 = vadd.f32 0.0, %v1502
        %v1504 = vpop.f32.mrb[0].mxu0
        %1505 = vmatprep.mubr.f32.mxu0 0.0
        %1506 = vmatmul.mubr.f32.gmra.mrb[0].mxu0 %v1408
        %v1507 = vpop.f32.mrb[0].mxu0
        %v1508 = vadd.f32 0.0, %v1507
        %v1509 = vpop.f32.mrb[0].mxu0
        %1510 = vmatprep.mubr.f32.mxu0 0.0
        %1511 = vmatmul.mubr.f32.gmra.mrb[0].mxu0 %v1411
        %v1512 = vpop.f32.mrb[0].mxu0
        %v1513 = vadd.f32 0.0, %v1512
        %v1514 = vpop.f32.mrb[0].mxu0
        %1515 = vmatprep.mubr.f32.mxu0 0.0
        %1516 = vmatmul.mubr.f32.gmra.mrb[0].mxu0 %v1414
        %v1517 = vpop.f32.mrb[0].mxu0
        %v1518 = vadd.f32 0.0, %v1517
        %v1519 = vpop.f32.mrb[0].mxu0
        %1520 = vdwg.mxu0
        %v1522 = vsel %vm202, %v1247, 0
        %v1525 = vsel %vm202, %v1248, 0
        %v1528 = vsel %vm202, %v1249, 0
        %v1531 = vsel %vm202, %v1250, 0
        %v1534 = vsel %vm202, %v1251, 0
        %v1537 = vsel %vm202, %v1252, 0
        %v1540 = vsel %vm202, %v1253, 0
        %v1543 = vsel %vm202, %v1254, 0
        %1545 = vmatprep.subr.mxu0 0.0
        %1546 = vmatpush1.msra.mxu0 %v154
        %1547 = vmatprep.subr.mxu0 0.0
        %1548 = vmatpush1.msra.mxu0 %v155
        %1549 = vmatprep.subr.mxu0 0.0
        %1550 = vmatpush1.msra.mxu0 %v156
        %1551 = vmatprep.subr.mxu0 0.0
        %1552 = vmatpush1.msra.mxu0 %v157
        %1553 = vmatprep.subr.mxu0 0.0
        %1554 = vmatpush1.msra.mxu0 %v158
        %1555 = vmatprep.subr.mxu0 0.0
        %1556 = vmatpush1.msra.mxu0 %v159
        %1557 = vmatprep.subr.mxu0 0.0
        %1558 = vmatpush1.msra.mxu0 %v160
        %1559 = vmatprep.subr.mxu0 0.0
        %1560 = vmatpush1.msra.mxu0 %v161
        %1561 = vmatprep.subr.mxu0 0.0
        %1562 = vmatpush1.msra.mxu0 0.0
        %1563 = vmatprep.subr.mxu0 0.0
        %1564 = vmatpush1.msra.mxu0 0.0
        %1565 = vmatprep.subr.mxu0 0.0
        %1566 = vmatpush1.msra.mxu0 0.0
        %1567 = vmatprep.subr.mxu0 0.0
        %1568 = vmatpush1.msra.mxu0 0.0
        %1569 = vmatprep.subr.mxu0 0.0
        %1570 = vmatpush1.msra.mxu0 0.0
        %1571 = vmatprep.subr.mxu0 0.0
        %1572 = vmatpush1.msra.mxu0 0.0
        %1573 = vmatprep.subr.mxu0 0.0
        %1574 = vmatpush1.msra.mxu0 0.0
        %1575 = vmatprep.subr.mxu0 0.0
        %1576 = vmatpush1.msra.mxu0 0.0
        %1577 = vmatprep.subr.mxu0 0.0
        %1578 = vmatpush1.msra.mxu0 0.0
        %1579 = vmatprep.subr.mxu0 0.0
        %1580 = vmatpush1.msra.mxu0 0.0
        %1581 = vmatprep.subr.mxu0 0.0
        %1582 = vmatpush1.msra.mxu0 0.0
        %1583 = vmatprep.subr.mxu0 0.0
        %1584 = vmatpush1.msra.mxu0 0.0
        %1585 = vmatprep.subr.mxu0 0.0
        %1586 = vmatpush1.msra.mxu0 0.0
        %1587 = vmatprep.subr.mxu0 0.0
        %1588 = vmatpush1.msra.mxu0 0.0
        %1589 = vmatprep.subr.mxu0 0.0
        %1590 = vmatpush1.msra.mxu0 0.0
        %1591 = vmatprep.subr.mxu0 0.0
        %1592 = vmatpush1.msra.mxu0 0.0
        %1593 = vmatprep.subr.mxu0 0.0
        %1594 = vmatpush1.msra.mxu0 0.0
        %1595 = vmatprep.subr.mxu0 0.0
        %1596 = vmatpush1.msra.mxu0 0.0
        %1597 = vmatprep.subr.mxu0 0.0
        %1598 = vmatpush1.msra.mxu0 0.0
        %1599 = vmatprep.subr.mxu0 0.0
        %1600 = vmatpush1.msra.mxu0 0.0
        %1601 = vmatprep.subr.mxu0 0.0
        %1602 = vmatpush1.msra.mxu0 0.0
        %1603 = vmatprep.subr.mxu0 0.0
        %1604 = vmatpush1.msra.mxu0 0.0
        %1605 = vmatprep.subr.mxu0 0.0
        %1606 = vmatpush1.msra.mxu0 0.0
        %1607 = vmatprep.subr.mxu0 0.0
        %1608 = vmatpush1.msra.mxu0 0.0
        %1609 = vmatprep.mubr.f32.mxu0 0.0
        %1610 = vmatmul.mubr.f32.gmra.mrb[0].mxu0 %v1522
        %v1611 = vpop.f32.mrb[0].mxu0
        %v1612 = vadd.f32 0.0, %v1611
        %v1613 = vpop.f32.mrb[0].mxu0
        %1614 = vmatprep.mubr.f32.mxu0 0.0
        %1615 = vmatmul.mubr.f32.gmra.mrb[0].mxu0 %v1525
        %v1616 = vpop.f32.mrb[0].mxu0
        %v1617 = vadd.f32 0.0, %v1616
        %v1618 = vpop.f32.mrb[0].mxu0
        %1619 = vmatprep.mubr.f32.mxu0 0.0
        %1620 = vmatmul.mubr.f32.gmra.mrb[0].mxu0 %v1528
        %v1621 = vpop.f32.mrb[0].mxu0
        %v1622 = vadd.f32 0.0, %v1621
        %v1623 = vpop.f32.mrb[0].mxu0
        %1624 = vmatprep.mubr.f32.mxu0 0.0
        %1625 = vmatmul.mubr.f32.gmra.mrb[0].mxu0 %v1531
        %v1626 = vpop.f32.mrb[0].mxu0
        %v1627 = vadd.f32 0.0, %v1626
        %v1628 = vpop.f32.mrb[0].mxu0
        %1629 = vmatprep.mubr.f32.mxu0 0.0
        %1630 = vmatmul.mubr.f32.gmra.mrb[0].mxu0 %v1534
        %v1631 = vpop.f32.mrb[0].mxu0
        %v1632 = vadd.f32 0.0, %v1631
        %v1633 = vpop.f32.mrb[0].mxu0
        %1634 = vmatprep.mubr.f32.mxu0 0.0
        %1635 = vmatmul.mubr.f32.gmra.mrb[0].mxu0 %v1537
        %v1636 = vpop.f32.mrb[0].mxu0
        %v1637 = vadd.f32 0.0, %v1636
        %v1638 = vpop.f32.mrb[0].mxu0
        %1639 = vmatprep.mubr.f32.mxu0 0.0
        %1640 = vmatmul.mubr.f32.gmra.mrb[0].mxu0 %v1540
        %v1641 = vpop.f32.mrb[0].mxu0
        %v1642 = vadd.f32 0.0, %v1641
        %v1643 = vpop.f32.mrb[0].mxu0
        %1644 = vmatprep.mubr.f32.mxu0 0.0
        %1645 = vmatmul.mubr.f32.gmra.mrb[0].mxu0 %v1543
        %v1646 = vpop.f32.mrb[0].mxu0
        %v1647 = vadd.f32 0.0, %v1646
        %v1648 = vpop.f32.mrb[0].mxu0
        %1649 = vdwg.mxu0
        %v1651 = vsel %vm202, %v1255, 0
        %v1654 = vsel %vm202, %v1256, 0
        %v1657 = vsel %vm202, %v1257, 0
        %v1660 = vsel %vm202, %v1258, 0
        %v1663 = vsel %vm202, %v1259, 0
        %v1666 = vsel %vm202, %v1260, 0
        %v1669 = vsel %vm202, %v1261, 0
        %v1672 = vsel %vm202, %v1262, 0
        %1674 = vmatprep.subr.mxu0 0.0
        %1675 = vmatpush1.msra.mxu0 %v162
        %1676 = vmatprep.subr.mxu0 0.0
        %1677 = vmatpush1.msra.mxu0 %v163
        %1678 = vmatprep.subr.mxu0 0.0
        %1679 = vmatpush1.msra.mxu0 %v164
        %1680 = vmatprep.subr.mxu0 0.0
        %1681 = vmatpush1.msra.mxu0 %v165
        %1682 = vmatprep.subr.mxu0 0.0
        %1683 = vmatpush1.msra.mxu0 %v166
        %1684 = vmatprep.subr.mxu0 0.0
        %1685 = vmatpush1.msra.mxu0 %v167
        %1686 = vmatprep.subr.mxu0 0.0
        %1687 = vmatpush1.msra.mxu0 %v168
        %1688 = vmatprep.subr.mxu0 0.0
        %1689 = vmatpush1.msra.mxu0 %v169
        %1690 = vmatprep.subr.mxu0 0.0
        %1691 = vmatpush1.msra.mxu0 0.0
        %1692 = vmatprep.subr.mxu0 0.0
        %1693 = vmatpush1.msra.mxu0 0.0
        %1694 = vmatprep.subr.mxu0 0.0
        %1695 = vmatpush1.msra.mxu0 0.0
        %1696 = vmatprep.subr.mxu0 0.0
        %1697 = vmatpush1.msra.mxu0 0.0
        %1698 = vmatprep.subr.mxu0 0.0
        %1699 = vmatpush1.msra.mxu0 0.0
        %1700 = vmatprep.subr.mxu0 0.0
        %1701 = vmatpush1.msra.mxu0 0.0
        %1702 = vmatprep.subr.mxu0 0.0
        %1703 = vmatpush1.msra.mxu0 0.0
        %1704 = vmatprep.subr.mxu0 0.0
        %1705 = vmatpush1.msra.mxu0 0.0
        %1706 = vmatprep.subr.mxu0 0.0
        %1707 = vmatpush1.msra.mxu0 0.0
        %1708 = vmatprep.subr.mxu0 0.0
        %1709 = vmatpush1.msra.mxu0 0.0
        %1710 = vmatprep.subr.mxu0 0.0
        %1711 = vmatpush1.msra.mxu0 0.0
        %1712 = vmatprep.subr.mxu0 0.0
        %1713 = vmatpush1.msra.mxu0 0.0
        %1714 = vmatprep.subr.mxu0 0.0
        %1715 = vmatpush1.msra.mxu0 0.0
        %1716 = vmatprep.subr.mxu0 0.0
        %1717 = vmatpush1.msra.mxu0 0.0
        %1718 = vmatprep.subr.mxu0 0.0
        %1719 = vmatpush1.msra.mxu0 0.0
        %1720 = vmatprep.subr.mxu0 0.0
        %1721 = vmatpush1.msra.mxu0 0.0
        %1722 = vmatprep.subr.mxu0 0.0
        %1723 = vmatpush1.msra.mxu0 0.0
        %1724 = vmatprep.subr.mxu0 0.0
        %1725 = vmatpush1.msra.mxu0 0.0
        %1726 = vmatprep.subr.mxu0 0.0
        %1727 = vmatpush1.msra.mxu0 0.0
        %1728 = vmatprep.subr.mxu0 0.0
        %1729 = vmatpush1.msra.mxu0 0.0
        %1730 = vmatprep.subr.mxu0 0.0
        %1731 = vmatpush1.msra.mxu0 0.0
        %1732 = vmatprep.subr.mxu0 0.0
        %1733 = vmatpush1.msra.mxu0 0.0
        %1734 = vmatprep.subr.mxu0 0.0
        %1735 = vmatpush1.msra.mxu0 0.0
        %1736 = vmatprep.subr.mxu0 0.0
        %1737 = vmatpush1.msra.mxu0 0.0
        %1738 = vmatprep.mubr.f32.mxu0 0.0
        %1739 = vmatmul.mubr.f32.gmra.mrb[0].mxu0 %v1651
        %v1740 = vpop.f32.mrb[0].mxu0
        %v1741 = vadd.f32 0.0, %v1740
        %v1742 = vpop.f32.mrb[0].mxu0
        %1743 = vmatprep.mubr.f32.mxu0 0.0
        %1744 = vmatmul.mubr.f32.gmra.mrb[0].mxu0 %v1654
        %v1745 = vpop.f32.mrb[0].mxu0
        %v1746 = vadd.f32 0.0, %v1745
        %v1747 = vpop.f32.mrb[0].mxu0
        %1748 = vmatprep.mubr.f32.mxu0 0.0
        %1749 = vmatmul.mubr.f32.gmra.mrb[0].mxu0 %v1657
        %v1750 = vpop.f32.mrb[0].mxu0
        %v1751 = vadd.f32 0.0, %v1750
        %v1752 = vpop.f32.mrb[0].mxu0
        %1753 = vmatprep.mubr.f32.mxu0 0.0
        %1754 = vmatmul.mubr.f32.gmra.mrb[0].mxu0 %v1660
        %v1755 = vpop.f32.mrb[0].mxu0
        %v1756 = vadd.f32 0.0, %v1755
        %v1757 = vpop.f32.mrb[0].mxu0
        %1758 = vmatprep.mubr.f32.mxu0 0.0
        %1759 = vmatmul.mubr.f32.gmra.mrb[0].mxu0 %v1663
        %v1760 = vpop.f32.mrb[0].mxu0
        %v1761 = vadd.f32 0.0, %v1760
        %v1762 = vpop.f32.mrb[0].mxu0
        %1763 = vmatprep.mubr.f32.mxu0 0.0
        %1764 = vmatmul.mubr.f32.gmra.mrb[0].mxu0 %v1666
        %v1765 = vpop.f32.mrb[0].mxu0
        %v1766 = vadd.f32 0.0, %v1765
        %v1767 = vpop.f32.mrb[0].mxu0
        %1768 = vmatprep.mubr.f32.mxu0 0.0
        %1769 = vmatmul.mubr.f32.gmra.mrb[0].mxu0 %v1669
        %v1770 = vpop.f32.mrb[0].mxu0
        %v1771 = vadd.f32 0.0, %v1770
        %v1772 = vpop.f32.mrb[0].mxu0
        %1773 = vmatprep.mubr.f32.mxu0 0.0
        %1774 = vmatmul.mubr.f32.gmra.mrb[0].mxu0 %v1672
        %v1775 = vpop.f32.mrb[0].mxu0
        %v1776 = vadd.f32 0.0, %v1775
        %v1777 = vpop.f32.mrb[0].mxu0
        %1778 = vdwg.mxu0
        %1779 = vst.msk [vmem:[%s135] sm:$0xff] %vm202, %v1354
        %1780 = vst.msk [vmem:[%s135 + $0x8] sm:$0xff] %vm202, %v1359
        %1781 = vst.msk [vmem:[%s135 + $0x10] sm:$0xff] %vm202, %v1364
        %1782 = vst.msk [vmem:[%s135 + $0x18] sm:$0xff] %vm202, %v1369
        %1783 = vst.msk [vmem:[%s135 + $0x20] sm:$0xff] %vm202, %v1374
        %1784 = vst.msk [vmem:[%s135 + $0x28] sm:$0xff] %vm202, %v1379
        %1785 = vst.msk [vmem:[%s135 + $0x30] sm:$0xff] %vm202, %v1384
        %1786 = vst.msk [vmem:[%s135 + $0x38] sm:$0xff] %vm202, %v1389
        %1787 = vst.msk [vmem:[%s135 + $0x40] sm:$0xff] %vm202, %v1483
        %1788 = vst.msk [vmem:[%s135 + $0x48] sm:$0xff] %vm202, %v1488
        %1789 = vst.msk [vmem:[%s135 + $0x50] sm:$0xff] %vm202, %v1493
        %1790 = vst.msk [vmem:[%s135 + $0x58] sm:$0xff] %vm202, %v1498
        %1791 = vst.msk [vmem:[%s135 + $0x60] sm:$0xff] %vm202, %v1503
        %1792 = vst.msk [vmem:[%s135 + $0x68] sm:$0xff] %vm202, %v1508
        %1793 = vst.msk [vmem:[%s135 + $0x70] sm:$0xff] %vm202, %v1513
        %1794 = vst.msk [vmem:[%s135 + $0x78] sm:$0xff] %vm202, %v1518
        %1795 = vst.msk [vmem:[%s135 + $0x80] sm:$0xff] %vm202, %v1612
        %1796 = vst.msk [vmem:[%s135 + $0x88] sm:$0xff] %vm202, %v1617
        %1797 = vst.msk [vmem:[%s135 + $0x90] sm:$0xff] %vm202, %v1622
        %1798 = vst.msk [vmem:[%s135 + $0x98] sm:$0xff] %vm202, %v1627
        %1799 = vst.msk [vmem:[%s135 + $0xa0] sm:$0xff] %vm202, %v1632
        %1800 = vst.msk [vmem:[%s135 + $0xa8] sm:$0xff] %vm202, %v1637
        %1801 = vst.msk [vmem:[%s135 + $0xb0] sm:$0xff] %vm202, %v1642
        %1802 = vst.msk [vmem:[%s135 + $0xb8] sm:$0xff] %vm202, %v1647
        %1803 = vst.msk [vmem:[%s135 + $0xc0] sm:$0xff] %vm202, %v1741
        %1804 = vst.msk [vmem:[%s135 + $0xc8] sm:$0xff] %vm202, %v1746
        %1805 = vst.msk [vmem:[%s135 + $0xd0] sm:$0xff] %vm202, %v1751
        %1806 = vst.msk [vmem:[%s135 + $0xd8] sm:$0xff] %vm202, %v1756
        %1807 = vst.msk [vmem:[%s135 + $0xe0] sm:$0xff] %vm202, %v1761
        %1808 = vst.msk [vmem:[%s135 + $0xe8] sm:$0xff] %vm202, %v1766
        %1809 = vst.msk [vmem:[%s135 + $0xf0] sm:$0xff] %vm202, %v1771
        %1810 = vst.msk [vmem:[%s135 + $0xf8] sm:$0xff] %vm202, %v1776
        %s1811 = sand.u32 %s52, 1
        %s1812 = scalar_lea.sflag [#allocation4], %s1811
        %s1813 = sand.u32 %s52, 1
        %s1814 = smul.addr %s1813, 256
        %s1815 = scalar_lea.vmem [#allocation5], %s1814
        // Predicated region
        $region29: #{tpu_custom_call.1} parent=23 // pred_check
          %p1816 = pneg %p62
        $region30: #{tpu_custom_call.1} parent=23 // pred_check_branch
          %1818 = sbr.rel (%p1816) target = $region32
        $region31: #{tpu_custom_call.1} parent=23 // pred_region
          %s1819 = smul.u32 4, %s18
          %s1821 = ssub.s32 4096, 4096
          %1822 = vsyncadd %s1812, %s1821
          %s1823 = smul.addr %s1819, 8
          %s1824 = smul.addr %s1823, 128
          %s1825 = scalar_lea.hbm %s1, %s1824
          %s1826 = sshll.u32 %s1815, 4
          %s1827 = int_to_ptr.vmem [resolvable:$true] %s1826
          %1832 = dma.vmem_to_hbm [thread:$0]  %s1827, 4096, %s1825, %s1812, 128, 128, 8
        $region32: #{tpu_custom_call.1} parent=23 // pred_fallthru
          _
      $region24: #{tpu_custom_call.1} parent=5 // pred_fallthru
        _
      %p1833 = scmp.le.s32.totalorder 2, %s13
      // Predicated region
      $region33: #{tpu_custom_call.1} parent=5 // pred_check
        %p1834 = pneg %p1833
      $region34: #{tpu_custom_call.1} parent=5 // pred_check_branch
        %1836 = sbr.rel (%p1834) target = $region36
      $region35: #{tpu_custom_call.1} parent=5 // pred_region
        %s1837 = ssub.s32 %s13, 2
        // Predicated region
        $region37: #{tpu_custom_call.1} parent=35 // pred_check
          %p1838 = pneg %p68
        $region38: #{tpu_custom_call.1} parent=35 // pred_check_branch
          %1840 = sbr.rel (%p1838) target = $region40
        $region39: #{tpu_custom_call.1} parent=35 // pred_region
          %s1841 = sand.u32 %s53, 1
          %s1842 = scalar_lea.sflag [#allocation4], %s1841
          %s1843 = sand.u32 %s53, 1
          %s1844 = smul.addr %s1843, 256
          %s1845 = scalar_lea.vmem [#allocation5], %s1844
          %1846 = dma.done %s1842, 4096
        $region40: #{tpu_custom_call.1} parent=35 // pred_fallthru
          _
      $region36: #{tpu_custom_call.1} parent=5 // pred_fallthru
        _
    $region6: #{tpu_custom_call.1} parent=1 // loop_footer
      %s17 = sadd.s32 1, %s13
    $region7: #{tpu_custom_call.1} parent=1 // loop_footer_branch
      %12 = sbr.rel target = $region3
    $region8: #{tpu_custom_call.1} parent=1 // loop_exit
      _
    %1847 = vsyncpa [#allocation3], 1
    %s1848 = scalar_lea.sflag [#allocation3], 1
    %1849 = vsyncpa %s1848, 1
    %1850 = vsyncpa [#allocation4], 1
    %s1851 = scalar_lea.sflag [#allocation4], 1
    %1852 = vsyncpa %s1851, 1

</llo_original>
